<compile_context>
chip_gen: v7x
topology: tpu7x:2x2x1
jax: 0.10.0
libtpu: 0.0.40
codegen_flags: <defaults>
</compile_context>

<pallas_src>
import math
import functools

import jax
import jax.numpy as jnp
from jax import lax
from jax.experimental import pallas as pl
from jax.experimental.pallas import tpu as pltpu


_NEG_BIG = -1e30  # finite mask value (robust vs inf-inf if ever extended with padding masks)


def _layernorm(v_f32, gamma_f32, beta_f32, eps=1e-5):
    mu = jnp.mean(v_f32, axis=-1, keepdims=True)
    var = jnp.mean((v_f32 - mu) ** 2, axis=-1, keepdims=True)
    return (v_f32 - mu) * lax.rsqrt(var + eps) * gamma_f32 + beta_f32


def encoder_block_kernel(
    x_ref, wq_ref, bq_ref, wkv_ref, bkv_ref, wo_ref, bo_ref,
    g1_ref, be1_ref, w1_ref, bf1_ref, w2_ref, bf2_ref, g2_ref, be2_ref,
    o_ref,
    kv_ref, q_sref, attn_ref,
    *, nhead, head_dim, q_tile,
):
    qi = pl.program_id(1)
    S, E = x_ref.shape[1], x_ref.shape[2]
    HD = nhead * head_dim
    TQ = q_tile
    cdt = x_ref.dtype  # matmul-operand dtype (bf16 models stay bf16 on the MXU)

    # ---- K/V for the full sequence: computed once per batch element, kept in VMEM ----
    @pl.when(qi == 0)
    def _():
        kv = jnp.dot(x_ref[0], wkv_ref[...], preferred_element_type=jnp.float32)
        kv_ref[...] = (kv + bkv_ref[...].astype(jnp.float32)).astype(cdt)

    # ---- per-tile Q for all heads (1/sqrt(head_dim) pre-folded into wq/bq) ----
    r0 = pl.multiple_of(qi * TQ, TQ)
    x_t = x_ref[0, pl.ds(r0, TQ), :]
    qv = jnp.dot(x_t, wq_ref[...], preferred_element_type=jnp.float32)
    q_sref[...] = (qv + bq_ref[...].astype(jnp.float32)).astype(cdt)

    # Causal mask for the DIAGONAL tile only (TQ == TK); tiles above are skipped,
    # tiles strictly below need no mask.
    row = lax.broadcasted_iota(jnp.int32, (TQ, TQ), 0)
    col = lax.broadcasted_iota(jnp.int32, (TQ, TQ), 1)
    diag_keep = col <= row

    def attend(q_h, k_t, v_t, m_i, l_i, acc, masked):
        # q @ k^T without materializing a transpose (NT dot_general), f32 accumulation.
        s = lax.dot_general(q_h, k_t, (((1,), (1,)), ((), ())),
                            preferred_element_type=jnp.float32)
        if masked:
            s = jnp.where(diag_keep, s, _NEG_BIG)
        m_new = jnp.maximum(m_i, jnp.max(s, axis=-1, keepdims=True))
        alpha = jnp.exp(m_i - m_new)
        p = jnp.exp(s - m_new)
        l_new = alpha * l_i + jnp.sum(p, axis=-1, keepdims=True)
        acc_new = alpha * acc + jnp.dot(p.astype(cdt), v_t,
                                        preferred_element_type=jnp.float32)
        return m_new, l_new, acc_new

    # Heads: small static loop; per-head state dies at the scratch write, so live
    # ranges stay bounded. KV tiles: fori_loop with dynamic (causal) trip count.
    for h in range(nhead):
        lo = h * head_dim
        q_h = q_sref[:, lo:lo + head_dim]

        def kv_body(ki, carry):
            m_i, l_i, acc = carry
            c0 = pl.multiple_of(ki * TQ, TQ)
            k_t = kv_ref[pl.ds(c0, TQ), lo:lo + head_dim]
            v_t = kv_ref[pl.ds(c0, TQ), HD + lo:HD + lo + head_dim]
            return attend(q_h, k_t, v_t, m_i, l_i, acc, masked=False)

        init = (jnp.full((TQ, 1), _NEG_BIG, jnp.float32),
                jnp.zeros((TQ, 1), jnp.float32),
                jnp.zeros((TQ, head_dim), jnp.float32))
        # kv tiles strictly below the diagonal (unmasked); tiles above never run.
        m_i, l_i, acc = lax.fori_loop(0, qi, kv_body, init)

        # diagonal tile with the causal mask
        k_t = kv_ref[pl.ds(r0, TQ), lo:lo + head_dim]
        v_t = kv_ref[pl.ds(r0, TQ), HD + lo:HD + lo + head_dim]
        m_i, l_i, acc = attend(q_h, k_t, v_t, m_i, l_i, acc, masked=True)

        # Normalize after PV (EUP reciprocal), write head output contiguous along lanes.
        attn_ref[:, lo:lo + head_dim] = (acc * pl.reciprocal(l_i, approx=True)).astype(cdt)

    # ---- single full-depth output projection on the MXU: (TQ, HD) @ (HD, E) ----
    attn = jnp.dot(attn_ref[...], wo_ref[...], preferred_element_type=jnp.float32)
    attn = attn + bo_ref[...].astype(jnp.float32)

    g1 = g1_ref[...].astype(jnp.float32)
    be1 = be1_ref[...].astype(jnp.float32)
    g2 = g2_ref[...].astype(jnp.float32)
    be2 = be2_ref[...].astype(jnp.float32)

    # post-norm: LayerNorm(x + attn)   (dropout == identity, eval semantics)
    h1 = _layernorm(x_t.astype(jnp.float32) + attn, g1, be1)

    # FFN: lin1 -> LeakyReLU(0.01) -> lin2, f32 accumulation
    f1 = jnp.dot(h1.astype(cdt), w1_ref[...], preferred_element_type=jnp.float32)
    f1 = f1 + bf1_ref[...].astype(jnp.float32)
    f1 = jnp.where(f1 >= 0, f1, 0.01 * f1)
    f2 = jnp.dot(f1.astype(cdt), w2_ref[...], preferred_element_type=jnp.float32)
    f2 = f2 + bf2_ref[...].astype(jnp.float32)

    # residual + LayerNorm 2, lane-dense full-block store of this q-tile
    o_ref[0] = _layernorm(h1 + f2, g2, be2).astype(o_ref.dtype)


def _vmem_capacity_bytes():
    try:
        return int(pltpu.get_tpu_info().vmem_capacity_bytes)
    except Exception:
        return 64 * 2 ** 20  # conservative (v7x physical) if the query is unavailable


def _pick_q_tile(S):
    try:
        kind = jax.devices()[0].device_kind.lower()
    except Exception:
        kind = ""
    # v5e: 4x128^2 MXU + 1 vst slot -> TQ=128 loses nothing and spills less.
    prefer = (128, 256) if "v5" in kind else (256, 128)
    for t in prefer + (64, 32, 16, 8):
        if t <= S and S % t == 0:
            return t
    return S


def _cost_estimate(B, S, E, HD, F, nhead, head_dim, itemsize, weight_bytes):
    flops = (
        2 * B * S * E * 3 * HD                                 # Q/K/V projections
        + 2 * B * S * HD * E                                   # Wo projection
        + 4 * B * S * E * F                                    # FFN
        + 2 * B * nhead * (S * S // 2) * (2 * head_dim)        # causal QK^T + PV
    )
    transcendentals = B * nhead * (S * S // 2) + 6 * B * S
    bytes_accessed = weight_bytes + 2 * B * S * E * itemsize   # x in + out
    return pl.CostEstimate(flops=int(flops), transcendentals=int(transcendentals),
                           bytes_accessed=int(bytes_accessed))


def prepare_params(raw, *, nhead, head_dim):
    """One-time parameter transform: split Wqkv/bqkv into Q and KV parts and fold
    1/sqrt(head_dim) into the Q weights/bias (removes the per-call score scaling)."""
    HD = nhead * head_dim
    scale = 1.0 / math.sqrt(head_dim)
    return {
        "wq": raw["wqkv"][:, :HD] * scale,
        "bq": raw["bqkv"][:, :HD] * scale,
        "wkv": raw["wqkv"][:, HD:],
        "bkv": raw["bqkv"][:, HD:],
        "wo": raw["wo"], "bo": raw["bo"],
        "g1": raw["g1"], "be1": raw["be1"],
        "w1": raw["w1"], "bf1": raw["bf1"],
        "w2": raw["w2"], "bf2": raw["bf2"],
        "g2": raw["g2"], "be2": raw["be2"],
    }


def transformer_encoder_block(x, kp, *, nhead, head_dim, q_tile=None):
    B, S, E = x.shape
    HD = nhead * head_dim
    F = kp["w1"].shape[1]
    TQ = q_tile if q_tile is not None else _pick_q_tile(S)
    assert S % TQ == 0, (S, TQ)
    n_q = S // TQ

    kernel = functools.partial(encoder_block_kernel,
                               nhead=nhead, head_dim=head_dim, q_tile=TQ)

    args = (x,
            kp["wq"], kp["bq"], kp["wkv"], kp["bkv"], kp["wo"], kp["bo"],
            kp["g1"], kp["be1"], kp["w1"], kp["bf1"], kp["w2"], kp["bf2"],
            kp["g2"], kp["be2"])

    itemsize = x.dtype.itemsize
    weight_bytes = sum(int(a.size) * a.dtype.itemsize for a in args[1:])
    cost = _cost_estimate(B, S, E, HD, F, nhead, head_dim, itemsize, weight_bytes)

    # VMEM budget from the real footprint.  Budget assumes double-buffered weights so
    # the (rare) default-buffering fallback is never silently under-provisioned; the
    # request is capped per TPU generation (v7x has only 64 MiB physical VMEM).
    act_bytes = (
        2 * S * E * itemsize + 2 * TQ * E * itemsize          # x / out pipeline buffers
        + S * 2 * HD * itemsize + 2 * TQ * HD * itemsize      # kv / q / attn scratch
        + S * 2 * HD * 4                                      # f32 KV-projection transient
        + 2 * TQ * F * 4                                      # FFN intermediates
        + 4 * TQ * TQ * 4                                     # score / exp tiles
        + 6 * TQ * E * 4                                      # attn / h1 / f2 / residual tiles
        + 4 * TQ * HD * 4                                     # per-head acc + Q-proj transient
    )
    vmem_needed = 2 * weight_bytes + int(1.25 * act_bytes) + 8 * 2 ** 20
    vmem_limit = max(1, min(vmem_needed, _vmem_capacity_bytes() - 8 * 2 ** 20))

    def build(single_buffer_weights):
        if single_buffer_weights:
            def wspec(shape):
                # Constant index map across the grid -> one resident copy, no refetch.
                return pl.BlockSpec(shape, lambda b, qi: (0,) * len(shape),
                                    pipeline_mode=pl.Buffered(1))
        else:
            def wspec(shape):
                return pl.BlockSpec(shape, lambda b, qi: (0,) * len(shape))

        return pl.pallas_call(
            kernel,
            out_shape=jax.ShapeDtypeStruct((B, S, E), x.dtype),
            grid_spec=pltpu.PrefetchScalarGridSpec(
                num_scalar_prefetch=0,
                grid=(B, n_q),
                in_specs=[
                    pl.BlockSpec((1, S, E), lambda b, qi: (b, 0, 0)),    # x (full seq per batch)
                    wspec((E, HD)), wspec((1, HD)),                       # Wq, bq (scale folded)
                    wspec((E, 2 * HD)), wspec((1, 2 * HD)),               # Wkv, bkv
                    wspec((HD, E)), wspec((1, E)),                        # Wo, bo
                    wspec((1, E)), wspec((1, E)),                         # gamma1, beta1
                    wspec((E, F)), wspec((1, F)),                         # W1, b1
                    wspec((F, E)), wspec((1, E)),                         # W2, b2
                    wspec((1, E)), wspec((1, E)),                         # gamma2, beta2
                ],
                out_specs=pl.BlockSpec((1, TQ, E), lambda b, qi: (b, qi, 0)),
                scratch_shapes=[
                    pltpu.VMEM((S, 2 * HD), x.dtype),   # K|V for the whole sequence
                    pltpu.VMEM((TQ, HD), x.dtype),      # Q slab for this tile
                    pltpu.VMEM((TQ, HD), x.dtype),      # per-head attention outputs
                ],
            ),
            compiler_params=pltpu.CompilerParams(
                dimension_semantics=("parallel", "arbitrary"),
                vmem_limit_bytes=int(vmem_limit),
            ),
            cost_estimate=cost,
        )

    try:
        return build(single_buffer_weights=True)(*args)
    except (TypeError, ValueError, NotImplementedError, RuntimeError,
            pltpu.LoweringException):
        # Narrow fallback for Pallas builds that reject pipeline_mode=pl.Buffered(1)
        # on pallas_call BlockSpecs.  The VMEM budget above already assumes two weight
        # copies, and any genuine kernel error re-surfaces from this second build.
        return build(single_buffer_weights=False)(*args)


# ---------------- pure-JAX reference (mirrors the PyTorch forward) ----------------
def reference_forward(x, params, *, nhead, head_dim):
    B, S, E = x.shape
    HD = nhead * head_dim

    qkv = x @ params["wqkv"] + params["bqkv"][0]                          # (B,S,3*HD)
    qkv = qkv.reshape(B, S, 3, nhead, head_dim).transpose(0, 3, 2, 1, 4)  # (B,H,3,S,D)
    q, k, v = qkv[:, :, 0], qkv[:, :, 1], qkv[:, :, 2]                    # (B,H,S,D)

    scores = jnp.einsum("bhqd,bhkd->bhqk", q, k) / math.sqrt(head_dim)
    mask = jnp.triu(jnp.full((S, S), -jnp.inf), k=1)[None, None]
    scores = scores + mask
    z = jnp.exp(scores - jnp.max(scores, axis=-1, keepdims=True))
    p = z / jnp.sum(z, axis=-1, keepdims=True)
    a = jnp.einsum("bhqk,bhkd->bhqd", p, v)
    a = a.transpose(0, 2, 1, 3).reshape(B, S, HD)
    attn_out = a @ params["wo"] + params["bo"][0]

    def ln(u, g, be, eps=1e-5):
        mu = jnp.mean(u, axis=-1, keepdims=True)
        var = jnp.mean((u - mu) ** 2, axis=-1, keepdims=True)
        return (u - mu) / jnp.sqrt(var + eps) * g + be

    h1 = ln(x + attn_out, params["g1"][0], params["be1"][0])
    f1 = h1 @ params["w1"] + params["bf1"][0]
    f1 = jnp.where(f1 >= 0, f1, 0.01 * f1)
    f2 = f1 @ params["w2"] + params["bf2"][0]
    return ln(h1 + f2, params["g2"][0], params["be2"][0])


def xavier_uniform(key, fan_in, fan_out):
    limit = math.sqrt(6.0 / (fan_in + fan_out))
    # stored as (in, out) so the kernel computes x @ W
    return jax.random.uniform(key, (fan_in, fan_out), jnp.float32, -limit, limit)


if __name__ == "__main__":
    # Small config consistent with the module defaults (scaled down).  E and ff_dim are
    # kept multiples of 128 so every output store is lane-dense.
    B, S, E = 2, 64, 128
    nhead, head_dim, ff_dim = 2, 64, 256
    HD = nhead * head_dim

    key = jax.random.PRNGKey(0)
    ks = jax.random.split(key, 12)

    raw = {
        "wqkv": xavier_uniform(ks[0], E, 3 * HD),
        "bqkv": 0.1 * jax.random.normal(ks[1], (1, 3 * HD), jnp.float32),
        "wo":   xavier_uniform(ks[2], HD, E),
        "bo":   0.1 * jax.random.normal(ks[3], (1, E), jnp.float32),
        "g1":   1.0 + 0.1 * jax.random.normal(ks[4], (1, E), jnp.float32),
        "be1":  0.1 * jax.random.normal(ks[5], (1, E), jnp.float32),
        "w1":   xavier_uniform(ks[6], E, ff_dim),
        "bf1":  0.1 * jax.random.normal(ks[7], (1, ff_dim), jnp.float32),
        "w2":   xavier_uniform(ks[8], ff_dim, E),
        "bf2":  0.1 * jax.random.normal(ks[9], (1, E), jnp.float32),
        "g2":   1.0 + 0.1 * jax.random.normal(ks[10], (1, E), jnp.float32),
        "be2":  0.1 * jax.random.normal(ks[11], (1, E), jnp.float32),
    }
    x = jax.random.normal(jax.random.PRNGKey(1), (B, S, E), jnp.float32)

    kp = prepare_params(raw, nhead=nhead, head_dim=head_dim)
    # q_tile=16 forces multiple q-tiles (exercises the causal flash fori_loop) at this
    # small demo sequence length; real configs use the per-generation auto tile.
    out = transformer_encoder_block(x, kp, nhead=nhead, head_dim=head_dim, q_tile=16)
    out = jax.block_until_ready(out)

    ref = reference_forward(x, raw, nhead=nhead, head_dim=head_dim)
    assert out.shape == (B, S, E)
    err = float(jnp.max(jnp.abs(out - ref)))
    # approx reciprocal in the softmax epilogue -> tolerance slightly above f32 exactness
    assert err < 5e-3, f"max abs error {err}"
    print("KERNEL_OK")
</pallas_src>

<mosaic_0001>
module attributes {stable_mosaic.version = 11 : i64} {
  func.func @encoder_block_kernel(%arg0: i32, %arg1: i32, %arg2: memref<1x64x128xf32, #tpu.memory_space<vmem>>, %arg3: memref<128x128xf32, #tpu.memory_space<vmem>>, %arg4: memref<1x128xf32, #tpu.memory_space<vmem>>, %arg5: memref<128x256xf32, #tpu.memory_space<vmem>>, %arg6: memref<1x256xf32, #tpu.memory_space<vmem>>, %arg7: memref<128x128xf32, #tpu.memory_space<vmem>>, %arg8: memref<1x128xf32, #tpu.memory_space<vmem>>, %arg9: memref<1x128xf32, #tpu.memory_space<vmem>>, %arg10: memref<1x128xf32, #tpu.memory_space<vmem>>, %arg11: memref<128x256xf32, #tpu.memory_space<vmem>>, %arg12: memref<1x256xf32, #tpu.memory_space<vmem>>, %arg13: memref<256x128xf32, #tpu.memory_space<vmem>>, %arg14: memref<1x128xf32, #tpu.memory_space<vmem>>, %arg15: memref<1x128xf32, #tpu.memory_space<vmem>>, %arg16: memref<1x128xf32, #tpu.memory_space<vmem>>, %arg17: memref<1x16x128xf32, #tpu.memory_space<vmem>>, %arg18: memref<64x256xf32, #tpu.memory_space<vmem>>, %arg19: memref<16x128xf32, #tpu.memory_space<vmem>>, %arg20: memref<16x128xf32, #tpu.memory_space<vmem>>) attributes {dimension_semantics = [#tpu.dimension_semantics<parallel>, #tpu.dimension_semantics<arbitrary>], iteration_bounds = array<i64: 2, 4>, scalar_prefetch = 0 : i64, scratch_operands = 3 : i64, tpu.core_type = #tpu.core_type<tc>, window_params = [{transform_indices = @transform_0, window_bounds = array<i64: 1, 64, 128>}, {pipeline_mode = #tpu.pipeline_mode<synchronous>, transform_indices = @transform_1, window_bounds = array<i64: 128, 128>}, {pipeline_mode = #tpu.pipeline_mode<synchronous>, transform_indices = @transform_2, window_bounds = array<i64: 1, 128>}, {pipeline_mode = #tpu.pipeline_mode<synchronous>, transform_indices = @transform_3, window_bounds = array<i64: 128, 256>}, {pipeline_mode = #tpu.pipeline_mode<synchronous>, transform_indices = @transform_4, window_bounds = array<i64: 1, 256>}, {pipeline_mode = #tpu.pipeline_mode<synchronous>, transform_indices = @transform_5, window_bounds = array<i64: 128, 128>}, {pipeline_mode = #tpu.pipeline_mode<synchronous>, transform_indices = @transform_6, window_bounds = array<i64: 1, 128>}, {pipeline_mode = #tpu.pipeline_mode<synchronous>, transform_indices = @transform_7, window_bounds = array<i64: 1, 128>}, {pipeline_mode = #tpu.pipeline_mode<synchronous>, transform_indices = @transform_8, window_bounds = array<i64: 1, 128>}, {pipeline_mode = #tpu.pipeline_mode<synchronous>, transform_indices = @transform_9, window_bounds = array<i64: 128, 256>}, {pipeline_mode = #tpu.pipeline_mode<synchronous>, transform_indices = @transform_10, window_bounds = array<i64: 1, 256>}, {pipeline_mode = #tpu.pipeline_mode<synchronous>, transform_indices = @transform_11, window_bounds = array<i64: 256, 128>}, {pipeline_mode = #tpu.pipeline_mode<synchronous>, transform_indices = @transform_12, window_bounds = array<i64: 1, 128>}, {pipeline_mode = #tpu.pipeline_mode<synchronous>, transform_indices = @transform_13, window_bounds = array<i64: 1, 128>}, {pipeline_mode = #tpu.pipeline_mode<synchronous>, transform_indices = @transform_14, window_bounds = array<i64: 1, 128>}, {transform_indices = @transform_15, window_bounds = array<i64: 1, 16, 128>}]} {
    %c0_i32 = arith.constant 0 : i32
    %0 = arith.cmpi eq, %arg1, %c0_i32 : i32
    %1 = arith.extui %0 : i1 to i32
    %c0_i32_0 = arith.constant 0 : i32
    %2 = arith.cmpi ne, %1, %c0_i32_0 : i32
    scf.if %2 {
      %c0_76 = arith.constant 0 : index
      %c0_77 = arith.constant 0 : index
      %c0_78 = arith.constant 0 : index
      %159 = vector.load %arg2[%c0_76, %c0_77, %c0_78] : memref<1x64x128xf32, #tpu.memory_space<vmem>>, vector<1x64x128xf32>
      %160 = vector.shape_cast %159 : vector<1x64x128xf32> to vector<64x128xf32>
      %c0_79 = arith.constant 0 : index
      %c0_80 = arith.constant 0 : index
      %161 = vector.load %arg5[%c0_79, %c0_80] : memref<128x256xf32, #tpu.memory_space<vmem>>, vector<128x256xf32>
      %cst_81 = arith.constant dense<0.000000e+00> : vector<64x256xf32>
      %162 = tpu.matmul %160, %161, %cst_81 {dimension_numbers = #tpu.dot_dimension_numbers<[1], [0], [0], [1], [0, 0, 1, 1], [], []>} : vector<64x128xf32>, vector<128x256xf32>, vector<64x256xf32> -> vector<64x256xf32>
      %c0_82 = arith.constant 0 : index
      %c0_83 = arith.constant 0 : index
      %163 = vector.load %arg6[%c0_82, %c0_83] : memref<1x256xf32, #tpu.memory_space<vmem>>, vector<1x256xf32>
      %164 = vector.broadcast %163 : vector<1x256xf32> to vector<64x256xf32>
      %165 = arith.addf %162, %164 : vector<64x256xf32>
      %c0_84 = arith.constant 0 : index
      %c0_85 = arith.constant 0 : index
      %166 = vector.load %arg18[%c0_84, %c0_85] : memref<64x256xf32, #tpu.memory_space<vmem>>, vector<64x256xf32>
      tpu.vector_store %arg18[%c0_84, %c0_85], %165 {strides = array<i32>} : memref<64x256xf32, #tpu.memory_space<vmem>>, vector<64x256xf32>,
    } else {
    }
    %c16_i32 = arith.constant 16 : i32
    %3 = arith.muli %arg1, %c16_i32 : i32
    %4 = tpu.assume_multiple %3, 16 : i32
    %c0 = arith.constant 0 : index
    %5 = arith.index_cast %4 : i32 to index
    %c0_1 = arith.constant 0 : index
    %6 = vector.load %arg2[%c0, %5, %c0_1] : memref<1x64x128xf32, #tpu.memory_space<vmem>>, vector<1x16x128xf32>
    %7 = vector.shape_cast %6 : vector<1x16x128xf32> to vector<16x128xf32>
    %c0_2 = arith.constant 0 : index
    %c0_3 = arith.constant 0 : index
    %8 = vector.load %arg3[%c0_2, %c0_3] : memref<128x128xf32, #tpu.memory_space<vmem>>, vector<128x128xf32>
    %cst = arith.constant dense<0.000000e+00> : vector<16x128xf32>
    %9 = tpu.matmul %7, %8, %cst {dimension_numbers = #tpu.dot_dimension_numbers<[1], [0], [0], [1], [0, 0, 1, 1], [], []>} : vector<16x128xf32>, vector<128x128xf32>, vector<16x128xf32> -> vector<16x128xf32>
    %c0_4 = arith.constant 0 : index
    %c0_5 = arith.constant 0 : index
    %10 = vector.load %arg4[%c0_4, %c0_5] : memref<1x128xf32, #tpu.memory_space<vmem>>, vector<1x128xf32>
    %11 = vector.broadcast %10 : vector<1x128xf32> to vector<16x128xf32>
    %12 = arith.addf %9, %11 : vector<16x128xf32>
    %c0_6 = arith.constant 0 : index
    %c0_7 = arith.constant 0 : index
    %13 = vector.load %arg19[%c0_6, %c0_7] : memref<16x128xf32, #tpu.memory_space<vmem>>, vector<16x128xf32>
    tpu.vector_store %arg19[%c0_6, %c0_7], %12 {strides = array<i32>} : memref<16x128xf32, #tpu.memory_space<vmem>>, vector<16x128xf32>,
    %14 = tpu.iota {dimensions = array<i32: 0>} : vector<16x16xi32>
    %15 = tpu.iota {dimensions = array<i32: 1>} : vector<16x16xi32>
    %16 = arith.cmpi sle, %15, %14 : vector<16x16xi32>
    %c0_8 = arith.constant 0 : index
    %c0_9 = arith.constant 0 : index
    %17 = vector.load %arg19[%c0_8, %c0_9] : memref<16x128xf32, #tpu.memory_space<vmem>>, vector<16x64xf32>
    %cst_10 = arith.constant -1.000000e+30 : f32
    %18 = vector.broadcast %cst_10 : f32 to vector<16x1xf32>
    %cst_11 = arith.constant 0.000000e+00 : f32
    %19 = vector.broadcast %cst_11 : f32 to vector<16x1xf32>
    %cst_12 = arith.constant 0.000000e+00 : f32
    %20 = vector.broadcast %cst_12 : f32 to vector<16x64xf32>
    %c0_i32_13 = arith.constant 0 : i32
    %21 = arith.subi %arg1, %c0_i32_13 : i32
    %22 = arith.addi %c0_i32_13, %21 : i32
    %c1_i32 = arith.constant 1 : i32
    %23:3 = scf.for %arg21 = %c0_i32_13 to %22 step %c1_i32 iter_args(%arg22 = %18, %arg23 = %19, %arg24 = %20) -> (vector<16x1xf32>, vector<16x1xf32>, vector<16x64xf32>)  : i32 {
      %c16_i32_76 = arith.constant 16 : i32
      %159 = arith.muli %arg21, %c16_i32_76 : i32
      %160 = tpu.assume_multiple %159, 16 : i32
      %161 = arith.index_cast %160 : i32 to index
      %c0_77 = arith.constant 0 : index
      %162 = vector.load %arg18[%161, %c0_77] : memref<64x256xf32, #tpu.memory_space<vmem>>, vector<16x64xf32>
      %163 = arith.index_cast %160 : i32 to index
      %c128_78 = arith.constant 128 : index
      %164 = vector.load %arg18[%163, %c128_78] : memref<64x256xf32, #tpu.memory_space<vmem>>, vector<16x64xf32>
      %cst_79 = arith.constant dense<0.000000e+00> : vector<16x16xf32>
      %165 = tpu.matmul %17, %162, %cst_79 {dimension_numbers = #tpu.dot_dimension_numbers<[1], [1], [0], [0], [0, 0, 1, 0], [], []>} : vector<16x64xf32>, vector<16x64xf32>, vector<16x16xf32> -> vector<16x16xf32>
      %cst_80 = arith.constant dense<0xFF800000> : vector<16xf32>
      %166 = vector.multi_reduction <maximumf>, %165, %cst_80 [1] : vector<16x16xf32> to vector<16xf32>
      %167 = vector.shape_cast %166 : vector<16xf32> to vector<16x1xf32>
      %168 = arith.maximumf %arg22, %167 : vector<16x1xf32>
      %169 = arith.subf %arg22, %168 : vector<16x1xf32>
      %170 = math.exp %169 : vector<16x1xf32>
      %171 = vector.broadcast %168 : vector<16x1xf32> to vector<16x16xf32>
      %172 = arith.subf %165, %171 : vector<16x16xf32>
      %173 = math.exp %172 : vector<16x16xf32>
      %174 = arith.mulf %170, %arg23 : vector<16x1xf32>
      %cst_81 = arith.constant dense<0.000000e+00> : vector<16xf32>
      %175 = vector.multi_reduction <add>, %173, %cst_81 [1] : vector<16x16xf32> to vector<16xf32>
      %176 = vector.shape_cast %175 : vector<16xf32> to vector<16x1xf32>
      %177 = arith.addf %174, %176 : vector<16x1xf32>
      %178 = vector.broadcast %170 : vector<16x1xf32> to vector<16x64xf32>
      %179 = arith.mulf %178, %arg24 : vector<16x64xf32>
      %cst_82 = arith.constant dense<0.000000e+00> : vector<16x64xf32>
      %180 = tpu.matmul %173, %164, %cst_82 {dimension_numbers = #tpu.dot_dimension_numbers<[1], [0], [0], [1], [0, 0, 1, 1], [], []>} : vector<16x16xf32>, vector<16x64xf32>, vector<16x64xf32> -> vector<16x64xf32>
      %181 = arith.addf %179, %180 : vector<16x64xf32>
      scf.yield %168, %177, %181 : vector<16x1xf32>, vector<16x1xf32>, vector<16x64xf32>
    }
    %24 = arith.index_cast %4 : i32 to index
    %c0_14 = arith.constant 0 : index
    %25 = vector.load %arg18[%24, %c0_14] : memref<64x256xf32, #tpu.memory_space<vmem>>, vector<16x64xf32>
    %26 = arith.index_cast %4 : i32 to index
    %c128 = arith.constant 128 : index
    %27 = vector.load %arg18[%26, %c128] : memref<64x256xf32, #tpu.memory_space<vmem>>, vector<16x64xf32>
    %cst_15 = arith.constant dense<0.000000e+00> : vector<16x16xf32>
    %28 = tpu.matmul %17, %25, %cst_15 {dimension_numbers = #tpu.dot_dimension_numbers<[1], [1], [0], [0], [0, 0, 1, 0], [], []>} : vector<16x64xf32>, vector<16x64xf32>, vector<16x16xf32> -> vector<16x16xf32>
    %cst_16 = arith.constant -1.000000e+30 : f32
    %29 = vector.broadcast %cst_16 : f32 to vector<16x16xf32>
    %30 = arith.select %16, %28, %29 : vector<16x16xi1>, vector<16x16xf32>
    %cst_17 = arith.constant dense<0xFF800000> : vector<16xf32>
    %31 = vector.multi_reduction <maximumf>, %30, %cst_17 [1] : vector<16x16xf32> to vector<16xf32>
    %32 = vector.shape_cast %31 : vector<16xf32> to vector<16x1xf32>
    %33 = arith.maximumf %23#0, %32 : vector<16x1xf32>
    %34 = arith.subf %23#0, %33 : vector<16x1xf32>
    %35 = math.exp %34 : vector<16x1xf32>
    %36 = vector.broadcast %33 : vector<16x1xf32> to vector<16x16xf32>
    %37 = arith.subf %30, %36 : vector<16x16xf32>
    %38 = math.exp %37 : vector<16x16xf32>
    %39 = arith.mulf %35, %23#1 : vector<16x1xf32>
    %cst_18 = arith.constant dense<0.000000e+00> : vector<16xf32>
    %40 = vector.multi_reduction <add>, %38, %cst_18 [1] : vector<16x16xf32> to vector<16xf32>
    %41 = vector.shape_cast %40 : vector<16xf32> to vector<16x1xf32>
    %42 = arith.addf %39, %41 : vector<16x1xf32>
    %43 = vector.broadcast %35 : vector<16x1xf32> to vector<16x64xf32>
    %44 = arith.mulf %43, %23#2 : vector<16x64xf32>
    %cst_19 = arith.constant dense<0.000000e+00> : vector<16x64xf32>
    %45 = tpu.matmul %38, %27, %cst_19 {dimension_numbers = #tpu.dot_dimension_numbers<[1], [0], [0], [1], [0, 0, 1, 1], [], []>} : vector<16x16xf32>, vector<16x64xf32>, vector<16x64xf32> -> vector<16x64xf32>
    %46 = arith.addf %44, %45 : vector<16x64xf32>
    %47 = tpu.reciprocal %42 {approx = true} : vector<16x1xf32> -> vector<16x1xf32>
    %48 = vector.broadcast %47 : vector<16x1xf32> to vector<16x64xf32>
    %49 = arith.mulf %46, %48 : vector<16x64xf32>
    %c0_20 = arith.constant 0 : index
    %c0_21 = arith.constant 0 : index
    %50 = vector.load %arg20[%c0_20, %c0_21] : memref<16x128xf32, #tpu.memory_space<vmem>>, vector<16x64xf32>
    tpu.vector_store %arg20[%c0_20, %c0_21], %49 {strides = array<i32>} : memref<16x128xf32, #tpu.memory_space<vmem>>, vector<16x64xf32>,
    %c0_22 = arith.constant 0 : index
    %c64 = arith.constant 64 : index
    %51 = vector.load %arg19[%c0_22, %c64] : memref<16x128xf32, #tpu.memory_space<vmem>>, vector<16x64xf32>
    %cst_23 = arith.constant -1.000000e+30 : f32
    %52 = vector.broadcast %cst_23 : f32 to vector<16x1xf32>
    %cst_24 = arith.constant 0.000000e+00 : f32
    %53 = vector.broadcast %cst_24 : f32 to vector<16x1xf32>
    %cst_25 = arith.constant 0.000000e+00 : f32
    %54 = vector.broadcast %cst_25 : f32 to vector<16x64xf32>
    %c0_i32_26 = arith.constant 0 : i32
    %55 = arith.subi %arg1, %c0_i32_26 : i32
    %56 = arith.addi %c0_i32_26, %55 : i32
    %c1_i32_27 = arith.constant 1 : i32
    %57:3 = scf.for %arg21 = %c0_i32_26 to %56 step %c1_i32_27 iter_args(%arg22 = %52, %arg23 = %53, %arg24 = %54) -> (vector<16x1xf32>, vector<16x1xf32>, vector<16x64xf32>)  : i32 {
      %c16_i32_76 = arith.constant 16 : i32
      %159 = arith.muli %arg21, %c16_i32_76 : i32
      %160 = tpu.assume_multiple %159, 16 : i32
      %161 = arith.index_cast %160 : i32 to index
      %c64_77 = arith.constant 64 : index
      %162 = vector.load %arg18[%161, %c64_77] : memref<64x256xf32, #tpu.memory_space<vmem>>, vector<16x64xf32>
      %163 = arith.index_cast %160 : i32 to index
      %c192_78 = arith.constant 192 : index
      %164 = vector.load %arg18[%163, %c192_78] : memref<64x256xf32, #tpu.memory_space<vmem>>, vector<16x64xf32>
      %cst_79 = arith.constant dense<0.000000e+00> : vector<16x16xf32>
      %165 = tpu.matmul %51, %162, %cst_79 {dimension_numbers = #tpu.dot_dimension_numbers<[1], [1], [0], [0], [0, 0, 1, 0], [], []>} : vector<16x64xf32>, vector<16x64xf32>, vector<16x16xf32> -> vector<16x16xf32>
      %cst_80 = arith.constant dense<0xFF800000> : vector<16xf32>
      %166 = vector.multi_reduction <maximumf>, %165, %cst_80 [1] : vector<16x16xf32> to vector<16xf32>
      %167 = vector.shape_cast %166 : vector<16xf32> to vector<16x1xf32>
      %168 = arith.maximumf %arg22, %167 : vector<16x1xf32>
      %169 = arith.subf %arg22, %168 : vector<16x1xf32>
      %170 = math.exp %169 : vector<16x1xf32>
      %171 = vector.broadcast %168 : vector<16x1xf32> to vector<16x16xf32>
      %172 = arith.subf %165, %171 : vector<16x16xf32>
      %173 = math.exp %172 : vector<16x16xf32>
      %174 = arith.mulf %170, %arg23 : vector<16x1xf32>
      %cst_81 = arith.constant dense<0.000000e+00> : vector<16xf32>
      %175 = vector.multi_reduction <add>, %173, %cst_81 [1] : vector<16x16xf32> to vector<16xf32>
      %176 = vector.shape_cast %175 : vector<16xf32> to vector<16x1xf32>
      %177 = arith.addf %174, %176 : vector<16x1xf32>
      %178 = vector.broadcast %170 : vector<16x1xf32> to vector<16x64xf32>
      %179 = arith.mulf %178, %arg24 : vector<16x64xf32>
      %cst_82 = arith.constant dense<0.000000e+00> : vector<16x64xf32>
      %180 = tpu.matmul %173, %164, %cst_82 {dimension_numbers = #tpu.dot_dimension_numbers<[1], [0], [0], [1], [0, 0, 1, 1], [], []>} : vector<16x16xf32>, vector<16x64xf32>, vector<16x64xf32> -> vector<16x64xf32>
      %181 = arith.addf %179, %180 : vector<16x64xf32>
      scf.yield %168, %177, %181 : vector<16x1xf32>, vector<16x1xf32>, vector<16x64xf32>
    }
    %58 = arith.index_cast %4 : i32 to index
    %c64_28 = arith.constant 64 : index
    %59 = vector.load %arg18[%58, %c64_28] : memref<64x256xf32, #tpu.memory_space<vmem>>, vector<16x64xf32>
    %60 = arith.index_cast %4 : i32 to index
    %c192 = arith.constant 192 : index
    %61 = vector.load %arg18[%60, %c192] : memref<64x256xf32, #tpu.memory_space<vmem>>, vector<16x64xf32>
    %cst_29 = arith.constant dense<0.000000e+00> : vector<16x16xf32>
    %62 = tpu.matmul %51, %59, %cst_29 {dimension_numbers = #tpu.dot_dimension_numbers<[1], [1], [0], [0], [0, 0, 1, 0], [], []>} : vector<16x64xf32>, vector<16x64xf32>, vector<16x16xf32> -> vector<16x16xf32>
    %cst_30 = arith.constant -1.000000e+30 : f32
    %63 = vector.broadcast %cst_30 : f32 to vector<16x16xf32>
    %64 = arith.select %16, %62, %63 : vector<16x16xi1>, vector<16x16xf32>
    %cst_31 = arith.constant dense<0xFF800000> : vector<16xf32>
    %65 = vector.multi_reduction <maximumf>, %64, %cst_31 [1] : vector<16x16xf32> to vector<16xf32>
    %66 = vector.shape_cast %65 : vector<16xf32> to vector<16x1xf32>
    %67 = arith.maximumf %57#0, %66 : vector<16x1xf32>
    %68 = arith.subf %57#0, %67 : vector<16x1xf32>
    %69 = math.exp %68 : vector<16x1xf32>
    %70 = vector.broadcast %67 : vector<16x1xf32> to vector<16x16xf32>
    %71 = arith.subf %64, %70 : vector<16x16xf32>
    %72 = math.exp %71 : vector<16x16xf32>
    %73 = arith.mulf %69, %57#1 : vector<16x1xf32>
    %cst_32 = arith.constant dense<0.000000e+00> : vector<16xf32>
    %74 = vector.multi_reduction <add>, %72, %cst_32 [1] : vector<16x16xf32> to vector<16xf32>
    %75 = vector.shape_cast %74 : vector<16xf32> to vector<16x1xf32>
    %76 = arith.addf %73, %75 : vector<16x1xf32>
    %77 = vector.broadcast %69 : vector<16x1xf32> to vector<16x64xf32>
    %78 = arith.mulf %77, %57#2 : vector<16x64xf32>
    %cst_33 = arith.constant dense<0.000000e+00> : vector<16x64xf32>
    %79 = tpu.matmul %72, %61, %cst_33 {dimension_numbers = #tpu.dot_dimension_numbers<[1], [0], [0], [1], [0, 0, 1, 1], [], []>} : vector<16x16xf32>, vector<16x64xf32>, vector<16x64xf32> -> vector<16x64xf32>
    %80 = arith.addf %78, %79 : vector<16x64xf32>
    %81 = tpu.reciprocal %76 {approx = true} : vector<16x1xf32> -> vector<16x1xf32>
    %82 = vector.broadcast %81 : vector<16x1xf32> to vector<16x64xf32>
    %83 = arith.mulf %80, %82 : vector<16x64xf32>
    %c0_34 = arith.constant 0 : index
    %c64_35 = arith.constant 64 : index
    %84 = vector.load %arg20[%c0_34, %c64_35] : memref<16x128xf32, #tpu.memory_space<vmem>>, vector<16x64xf32>
    tpu.vector_store %arg20[%c0_34, %c64_35], %83 {strides = array<i32>} : memref<16x128xf32, #tpu.memory_space<vmem>>, vector<16x64xf32>,
    %c0_36 = arith.constant 0 : index
    %c0_37 = arith.constant 0 : index
    %85 = vector.load %arg20[%c0_36, %c0_37] : memref<16x128xf32, #tpu.memory_space<vmem>>, vector<16x128xf32>
    %c0_38 = arith.constant 0 : index
    %c0_39 = arith.constant 0 : index
    %86 = vector.load %arg7[%c0_38, %c0_39] : memref<128x128xf32, #tpu.memory_space<vmem>>, vector<128x128xf32>
    %cst_40 = arith.constant dense<0.000000e+00> : vector<16x128xf32>
    %87 = tpu.matmul %85, %86, %cst_40 {dimension_numbers = #tpu.dot_dimension_numbers<[1], [0], [0], [1], [0, 0, 1, 1], [], []>} : vector<16x128xf32>, vector<128x128xf32>, vector<16x128xf32> -> vector<16x128xf32>
    %c0_41 = arith.constant 0 : index
    %c0_42 = arith.constant 0 : index
    %88 = vector.load %arg8[%c0_41, %c0_42] : memref<1x128xf32, #tpu.memory_space<vmem>>, vector<1x128xf32>
    %89 = vector.broadcast %88 : vector<1x128xf32> to vector<16x128xf32>
    %90 = arith.addf %87, %89 : vector<16x128xf32>
    %c0_43 = arith.constant 0 : index
    %c0_44 = arith.constant 0 : index
    %91 = vector.load %arg9[%c0_43, %c0_44] : memref<1x128xf32, #tpu.memory_space<vmem>>, vector<1x128xf32>
    %c0_45 = arith.constant 0 : index
    %c0_46 = arith.constant 0 : index
    %92 = vector.load %arg10[%c0_45, %c0_46] : memref<1x128xf32, #tpu.memory_space<vmem>>, vector<1x128xf32>
    %c0_47 = arith.constant 0 : index
    %c0_48 = arith.constant 0 : index
    %93 = vector.load %arg15[%c0_47, %c0_48] : memref<1x128xf32, #tpu.memory_space<vmem>>, vector<1x128xf32>
    %c0_49 = arith.constant 0 : index
    %c0_50 = arith.constant 0 : index
    %94 = vector.load %arg16[%c0_49, %c0_50] : memref<1x128xf32, #tpu.memory_space<vmem>>, vector<1x128xf32>
    %95 = arith.addf %7, %90 : vector<16x128xf32>
    %cst_51 = arith.constant dense<0.000000e+00> : vector<16xf32>
    %96 = vector.multi_reduction <add>, %95, %cst_51 [1] : vector<16x128xf32> to vector<16xf32>
    %97 = vector.shape_cast %96 : vector<16xf32> to vector<16x1xf32>
    %cst_52 = arith.constant 1.280000e+02 : f32
    %98 = vector.broadcast %cst_52 : f32 to vector<16x1xf32>
    %99 = arith.divf %97, %98 : vector<16x1xf32>
    %100 = vector.broadcast %99 : vector<16x1xf32> to vector<16x128xf32>
    %101 = arith.subf %95, %100 : vector<16x128xf32>
    %102 = arith.mulf %101, %101 : vector<16x128xf32>
    %cst_53 = arith.constant dense<0.000000e+00> : vector<16xf32>
    %103 = vector.multi_reduction <add>, %102, %cst_53 [1] : vector<16x128xf32> to vector<16xf32>
    %104 = vector.shape_cast %103 : vector<16xf32> to vector<16x1xf32>
    %cst_54 = arith.constant 1.280000e+02 : f32
    %105 = vector.broadcast %cst_54 : f32 to vector<16x1xf32>
    %106 = arith.divf %104, %105 : vector<16x1xf32>
    %107 = vector.broadcast %99 : vector<16x1xf32> to vector<16x128xf32>
    %108 = arith.subf %95, %107 : vector<16x128xf32>
    %cst_55 = arith.constant 9.99999974E-6 : f32
    %109 = vector.broadcast %cst_55 : f32 to vector<16x1xf32>
    %110 = arith.addf %106, %109 : vector<16x1xf32>
    %111 = math.rsqrt %110 : vector<16x1xf32>
    %112 = vector.broadcast %111 : vector<16x1xf32> to vector<16x128xf32>
    %113 = arith.mulf %108, %112 : vector<16x128xf32>
    %114 = vector.broadcast %91 : vector<1x128xf32> to vector<16x128xf32>
    %115 = arith.mulf %113, %114 : vector<16x128xf32>
    %116 = vector.broadcast %92 : vector<1x128xf32> to vector<16x128xf32>
    %117 = arith.addf %115, %116 : vector<16x128xf32>
    %c0_56 = arith.constant 0 : index
    %c0_57 = arith.constant 0 : index
    %118 = vector.load %arg11[%c0_56, %c0_57] : memref<128x256xf32, #tpu.memory_space<vmem>>, vector<128x256xf32>
    %cst_58 = arith.constant dense<0.000000e+00> : vector<16x256xf32>
    %119 = tpu.matmul %117, %118, %cst_58 {dimension_numbers = #tpu.dot_dimension_numbers<[1], [0], [0], [1], [0, 0, 1, 1], [], []>} : vector<16x128xf32>, vector<128x256xf32>, vector<16x256xf32> -> vector<16x256xf32>
    %c0_59 = arith.constant 0 : index
    %c0_60 = arith.constant 0 : index
    %120 = vector.load %arg12[%c0_59, %c0_60] : memref<1x256xf32, #tpu.memory_space<vmem>>, vector<1x256xf32>
    %121 = vector.broadcast %120 : vector<1x256xf32> to vector<16x256xf32>
    %122 = arith.addf %119, %121 : vector<16x256xf32>
    %cst_61 = arith.constant 0.000000e+00 : f32
    %123 = vector.broadcast %cst_61 : f32 to vector<16x256xf32>
    %124 = arith.cmpf oge, %122, %123 : vector<16x256xf32>
    %cst_62 = arith.constant 0.00999999977 : f32
    %125 = vector.broadcast %cst_62 : f32 to vector<16x256xf32>
    %126 = arith.mulf %125, %122 : vector<16x256xf32>
    %127 = arith.select %124, %122, %126 : vector<16x256xi1>, vector<16x256xf32>
    %c0_63 = arith.constant 0 : index
    %c0_64 = arith.constant 0 : index
    %128 = vector.load %arg13[%c0_63, %c0_64] : memref<256x128xf32, #tpu.memory_space<vmem>>, vector<256x128xf32>
    %cst_65 = arith.constant dense<0.000000e+00> : vector<16x128xf32>
    %129 = tpu.matmul %127, %128, %cst_65 {dimension_numbers = #tpu.dot_dimension_numbers<[1], [0], [0], [1], [0, 0, 1, 1], [], []>} : vector<16x256xf32>, vector<256x128xf32>, vector<16x128xf32> -> vector<16x128xf32>
    %c0_66 = arith.constant 0 : index
    %c0_67 = arith.constant 0 : index
    %130 = vector.load %arg14[%c0_66, %c0_67] : memref<1x128xf32, #tpu.memory_space<vmem>>, vector<1x128xf32>
    %131 = vector.broadcast %130 : vector<1x128xf32> to vector<16x128xf32>
    %132 = arith.addf %129, %131 : vector<16x128xf32>
    %133 = arith.addf %117, %132 : vector<16x128xf32>
    %cst_68 = arith.constant dense<0.000000e+00> : vector<16xf32>
    %134 = vector.multi_reduction <add>, %133, %cst_68 [1] : vector<16x128xf32> to vector<16xf32>
    %135 = vector.shape_cast %134 : vector<16xf32> to vector<16x1xf32>
    %cst_69 = arith.constant 1.280000e+02 : f32
    %136 = vector.broadcast %cst_69 : f32 to vector<16x1xf32>
    %137 = arith.divf %135, %136 : vector<16x1xf32>
    %138 = vector.broadcast %137 : vector<16x1xf32> to vector<16x128xf32>
    %139 = arith.subf %133, %138 : vector<16x128xf32>
    %140 = arith.mulf %139, %139 : vector<16x128xf32>
    %cst_70 = arith.constant dense<0.000000e+00> : vector<16xf32>
    %141 = vector.multi_reduction <add>, %140, %cst_70 [1] : vector<16x128xf32> to vector<16xf32>
    %142 = vector.shape_cast %141 : vector<16xf32> to vector<16x1xf32>
    %cst_71 = arith.constant 1.280000e+02 : f32
    %143 = vector.broadcast %cst_71 : f32 to vector<16x1xf32>
    %144 = arith.divf %142, %143 : vector<16x1xf32>
    %145 = vector.broadcast %137 : vector<16x1xf32> to vector<16x128xf32>
    %146 = arith.subf %133, %145 : vector<16x128xf32>
    %cst_72 = arith.constant 9.99999974E-6 : f32
    %147 = vector.broadcast %cst_72 : f32 to vector<16x1xf32>
    %148 = arith.addf %144, %147 : vector<16x1xf32>
    %149 = math.rsqrt %148 : vector<16x1xf32>
    %150 = vector.broadcast %149 : vector<16x1xf32> to vector<16x128xf32>
    %151 = arith.mulf %146, %150 : vector<16x128xf32>
    %152 = vector.broadcast %93 : vector<1x128xf32> to vector<16x128xf32>
    %153 = arith.mulf %151, %152 : vector<16x128xf32>
    %154 = vector.broadcast %94 : vector<1x128xf32> to vector<16x128xf32>
    %155 = arith.addf %153, %154 : vector<16x128xf32>
    %c0_73 = arith.constant 0 : index
    %c0_74 = arith.constant 0 : index
    %c0_75 = arith.constant 0 : index
    %156 = vector.load %arg17[%c0_73, %c0_74, %c0_75] : memref<1x16x128xf32, #tpu.memory_space<vmem>>, vector<1x16x128xf32>
    %157 = vector.shape_cast %156 : vector<1x16x128xf32> to vector<16x128xf32>
    %158 = vector.shape_cast %155 : vector<16x128xf32> to vector<1x16x128xf32>
    tpu.vector_store %arg17[%c0_73, %c0_74, %c0_75], %158 {strides = array<i32>} : memref<1x16x128xf32, #tpu.memory_space<vmem>>, vector<1x16x128xf32>,
    return
  }
  func.func @transform_0(%arg0: i32, %arg1: i32) -> (i32, i32, i32) {
    %c0_i32 = arith.constant 0 : i32
    %c0_i32_0 = arith.constant 0 : i32
    %c0_i32_1 = arith.constant 0 : i32
    return %arg0, %c0_i32, %c0_i32_0 : i32, i32, i32
  }
  func.func @transform_1(%arg0: i32, %arg1: i32) -> (i32, i32) {
    %c0_i32 = arith.constant 0 : i32
    %c0_i32_0 = arith.constant 0 : i32
    %c0_i32_1 = arith.constant 0 : i32
    return %c0_i32, %c0_i32_0 : i32, i32
  }
  func.func @transform_2(%arg0: i32, %arg1: i32) -> (i32, i32) {
    %c0_i32 = arith.constant 0 : i32
    %c0_i32_0 = arith.constant 0 : i32
    %c0_i32_1 = arith.constant 0 : i32
    return %c0_i32, %c0_i32_0 : i32, i32
  }
  func.func @transform_3(%arg0: i32, %arg1: i32) -> (i32, i32) {
    %c0_i32 = arith.constant 0 : i32
    %c0_i32_0 = arith.constant 0 : i32
    %c0_i32_1 = arith.constant 0 : i32
    return %c0_i32, %c0_i32_0 : i32, i32
  }
  func.func @transform_4(%arg0: i32, %arg1: i32) -> (i32, i32) {
    %c0_i32 = arith.constant 0 : i32
    %c0_i32_0 = arith.constant 0 : i32
    %c0_i32_1 = arith.constant 0 : i32
    return %c0_i32, %c0_i32_0 : i32, i32
  }
  func.func @transform_5(%arg0: i32, %arg1: i32) -> (i32, i32) {
    %c0_i32 = arith.constant 0 : i32
    %c0_i32_0 = arith.constant 0 : i32
    %c0_i32_1 = arith.constant 0 : i32
    return %c0_i32, %c0_i32_0 : i32, i32
  }
  func.func @transform_6(%arg0: i32, %arg1: i32) -> (i32, i32) {
    %c0_i32 = arith.constant 0 : i32
    %c0_i32_0 = arith.constant 0 : i32
    %c0_i32_1 = arith.constant 0 : i32
    return %c0_i32, %c0_i32_0 : i32, i32
  }
  func.func @transform_7(%arg0: i32, %arg1: i32) -> (i32, i32) {
    %c0_i32 = arith.constant 0 : i32
    %c0_i32_0 = arith.constant 0 : i32
    %c0_i32_1 = arith.constant 0 : i32
    return %c0_i32, %c0_i32_0 : i32, i32
  }
  func.func @transform_8(%arg0: i32, %arg1: i32) -> (i32, i32) {
    %c0_i32 = arith.constant 0 : i32
    %c0_i32_0 = arith.constant 0 : i32
    %c0_i32_1 = arith.constant 0 : i32
    return %c0_i32, %c0_i32_0 : i32, i32
  }
  func.func @transform_9(%arg0: i32, %arg1: i32) -> (i32, i32) {
    %c0_i32 = arith.constant 0 : i32
    %c0_i32_0 = arith.constant 0 : i32
    %c0_i32_1 = arith.constant 0 : i32
    return %c0_i32, %c0_i32_0 : i32, i32
  }
  func.func @transform_10(%arg0: i32, %arg1: i32) -> (i32, i32) {
    %c0_i32 = arith.constant 0 : i32
    %c0_i32_0 = arith.constant 0 : i32
    %c0_i32_1 = arith.constant 0 : i32
    return %c0_i32, %c0_i32_0 : i32, i32
  }
  func.func @transform_11(%arg0: i32, %arg1: i32) -> (i32, i32) {
    %c0_i32 = arith.constant 0 : i32
    %c0_i32_0 = arith.constant 0 : i32
    %c0_i32_1 = arith.constant 0 : i32
    return %c0_i32, %c0_i32_0 : i32, i32
  }
  func.func @transform_12(%arg0: i32, %arg1: i32) -> (i32, i32) {
    %c0_i32 = arith.constant 0 : i32
    %c0_i32_0 = arith.constant 0 : i32
    %c0_i32_1 = arith.constant 0 : i32
    return %c0_i32, %c0_i32_0 : i32, i32
  }
  func.func @transform_13(%arg0: i32, %arg1: i32) -> (i32, i32) {
    %c0_i32 = arith.constant 0 : i32
    %c0_i32_0 = arith.constant 0 : i32
    %c0_i32_1 = arith.constant 0 : i32
    return %c0_i32, %c0_i32_0 : i32, i32
  }
  func.func @transform_14(%arg0: i32, %arg1: i32) -> (i32, i32) {
    %c0_i32 = arith.constant 0 : i32
    %c0_i32_0 = arith.constant 0 : i32
    %c0_i32_1 = arith.constant 0 : i32
    return %c0_i32, %c0_i32_0 : i32, i32
  }
  func.func @transform_15(%arg0: i32, %arg1: i32) -> (i32, i32, i32) {
    %c0_i32 = arith.constant 0 : i32
    %c0_i32_0 = arith.constant 0 : i32
    return %arg0, %arg1, %c0_i32 : i32, i32, i32
  }
}

</mosaic_0001>

<llo_original>
// kernel: tpu_custom_call.1
$region0: #{tpu_custom_call.1}
  #allocation0 [shape = 'u32[]', space=smem, size = 0x4, offset = 0x4, fixed_abs, tag = 'smem constant byte address 0x4 - core index']
  #allocation1 [shape = 'u32[144,128]{1,0:T(1,128)}', space=vmem, size = 0x12000, scoped, tag = 'internal scratch']
  #allocation2 [shape = 'f32[64,256]{1,0:T(8,128)}', space=vmem, size = 0x10000, scoped, tag = 'scratch operand']
  #allocation3 [shape = 'f32[16,128]{1,0:T(8,128)}', space=vmem, size = 0x2000, scoped, tag = 'scratch operand']
  #allocation4 [shape = 'f32[16,128]{1,0:T(8,128)}', space=vmem, size = 0x2000, scoped, tag = 'scratch operand']
  %s0 = inlined_call_operand.hbm [shape: f32[2,64,128], index: 0, kind: input, shape index: {}]
  %s1 = inlined_call_operand.hbm [shape: f32[128,128], index: 1, kind: input, shape index: {}]
  %s2 = inlined_call_operand.vmem [shape: f32[1,128], index: 2, kind: input, shape index: {}]
  %s3 = inlined_call_operand.hbm [shape: f32[128,256], index: 3, kind: input, shape index: {}]
  %s4 = inlined_call_operand.vmem [shape: f32[1,256], index: 4, kind: input, shape index: {}]
  %s5 = inlined_call_operand.hbm [shape: f32[128,128], index: 5, kind: input, shape index: {}]
  %s6 = inlined_call_operand.vmem [shape: f32[1,128], index: 6, kind: input, shape index: {}]
  %s7 = inlined_call_operand.vmem [shape: f32[1,128], index: 7, kind: input, shape index: {}]
  %s8 = inlined_call_operand.vmem [shape: f32[1,128], index: 8, kind: input, shape index: {}]
  %s9 = inlined_call_operand.hbm [shape: f32[128,256], index: 9, kind: input, shape index: {}]
  %s10 = inlined_call_operand.vmem [shape: f32[1,256], index: 10, kind: input, shape index: {}]
  %s11 = inlined_call_operand.hbm [shape: f32[256,128], index: 11, kind: input, shape index: {}]
  %s12 = inlined_call_operand.vmem [shape: f32[1,128], index: 12, kind: input, shape index: {}]
  %s13 = inlined_call_operand.vmem [shape: f32[1,128], index: 13, kind: input, shape index: {}]
  %s14 = inlined_call_operand.vmem [shape: f32[1,128], index: 14, kind: input, shape index: {}]
  %s15 = inlined_call_operand.hbm [shape: f32[2,64,128], index: 15, kind: output, shape index: {}]
  %s16 = sld [smem:[#allocation0]]
  $region135: #{tpu_custom_call.1} parent=0
    _
  %s18 = ssub.s32 1, %s16
  %s19 = scalar_select 0, %s18, %s16
  $region1: #{tpu_custom_call.1} parent=0
    #allocation5 [shape = 'u8[65536]{0}', space=vmem, size = 0x10000, scoped, tag = 'input window, operand 0']
    #allocation6 [shape = 's32[2]{0}', space=sflag, size = 0x8, scoped, tag = 'scoped memory for tpu_custom_call.1']
    #allocation7 [shape = 's32[2]{0}', space=sflag, size = 0x8, scoped, tag = 'scoped memory for tpu_custom_call.1']
    #allocation8 [shape = 'u8[65536]{0}', space=vmem, size = 0x10000, scoped, tag = 'input window, operand 1, single buffered']
    #allocation9 [shape = 's32[1]{0}', space=sflag, size = 0x4, scoped, tag = 'scoped memory for tpu_custom_call.1']
    #allocation10 [shape = 'u8[131072]{0}', space=vmem, size = 0x20000, scoped, tag = 'input window, operand 3, single buffered']
    #allocation11 [shape = 'u8[65536]{0}', space=vmem, size = 0x10000, scoped, tag = 'input window, operand 5, single buffered']
    #allocation12 [shape = 's32[1]{0}', space=sflag, size = 0x4, scoped, tag = 'scoped memory for tpu_custom_call.1']
    #allocation13 [shape = 'u8[131072]{0}', space=vmem, size = 0x20000, scoped, tag = 'input window, operand 9, single buffered']
    #allocation14 [shape = 'u8[131072]{0}', space=vmem, size = 0x20000, scoped, tag = 'input window, operand 11, single buffered']
    #allocation15 [shape = 's32[1]{0}', space=sflag, size = 0x4, scoped, tag = 'scoped memory for tpu_custom_call.1']
    #allocation16 [shape = 'u8[16384]{0}', space=vmem, size = 0x4000, scoped, tag = 'output window, operand 0']
    %20 = vsyncpa [#allocation6], 0
    %s21 = scalar_lea.sflag [#allocation6], 1
    %22 = vsyncpa %s21, 0
    %23 = vsyncpa [#allocation9], 0
    %24 = vsyncpa [#allocation12], 0
    %25 = vsyncpa [#allocation15], 0
    %26 = vsyncpa [#allocation7], 0
    %s27 = scalar_lea.sflag [#allocation7], 1
    %28 = vsyncpa %s27, 0
    loop: start=0, step=1, limit=10
    $region2: #{tpu_custom_call.1} parent=1 // loop_pre_header
      _
    $region3: #{tpu_custom_call.1} parent=1 // loop_header
      %s30 = sphi 0, %s34
      %p31 = scmp.ge.s32.totalorder %s30, 10
      %s37 = sphi 0, %s49
      %s38 = sphi 0, %s45
      %s39 = sphi 0, %s37
      %s40 = sphi 0, %s38
      %s41 = sphi 0, %s39
      %s42 = sphi 0, %s40
      %s52 = sphi 0, %s54
      %s55 = sphi 0, %s52
      %s56 = sphi 0, %s55
      %s72 = sphi 0, %s56
      %s76 = sphi 0, %s76
      %s78 = sphi 0, %s76
      %s79 = sphi 0, %s78
      %s93 = sphi 0, %s79
      %s97 = sphi 0, %s97
      %s99 = sphi 0, %s97
      %s100 = sphi 0, %s99
      %s114 = sphi 0, %s100
      %s118 = sphi 0, %s118
      %s120 = sphi 0, %s118
      %s121 = sphi 0, %s120
      %s135 = sphi 0, %s121
      %s139 = sphi 0, %s139
      %s141 = sphi 0, %s139
      %s142 = sphi 0, %s141
      %s156 = sphi 0, %s142
      %s160 = sphi 0, %s160
      %s162 = sphi 0, %s160
      %s163 = sphi 0, %s162
      %s177 = sphi 0, %s163
      %s181 = sphi 0, %s181
      %s183 = sphi 0, %s181
      %s184 = sphi 0, %s183
      %s198 = sphi 0, %s184
      %s202 = sphi 0, %s202
      %s204 = sphi 0, %s202
      %s205 = sphi 0, %s204
      %s219 = sphi 0, %s205
      %s223 = sphi 0, %s223
      %s225 = sphi 0, %s223
      %s226 = sphi 0, %s225
      %s240 = sphi 0, %s226
      %s244 = sphi 0, %s244
      %s246 = sphi 0, %s244
      %s247 = sphi 0, %s246
      %s261 = sphi 0, %s247
      %s265 = sphi 0, %s265
      %s267 = sphi 0, %s265
      %s268 = sphi 0, %s267
      %s282 = sphi 0, %s268
      %s286 = sphi 0, %s286
      %s288 = sphi 0, %s286
      %s289 = sphi 0, %s288
      %s303 = sphi 0, %s289
      %s307 = sphi 0, %s307
      %s309 = sphi 0, %s307
      %s310 = sphi 0, %s309
      %s324 = sphi 0, %s310
      %s328 = sphi 0, %s328
      %s330 = sphi 0, %s328
      %s331 = sphi 0, %s330
      %s345 = sphi 0, %s331
      %s349 = sphi 0, %s349
      %s351 = sphi 0, %s349
      %s352 = sphi 0, %s351
      %s366 = sphi 0, %s352
      %s374 = sphi 0, %s376
      %s377 = sphi 0, %s374
      %s378 = sphi 0, %s377
      %s394 = sphi 0, %s378
    $region4: #{tpu_custom_call.1} parent=1 // loop_header_branch
      %33 = sbr.rel (%p31) target = $region8
    $region5: #{tpu_custom_call.1} parent=1 // loop_body
      %s35 = ssub.s32 %s30, 1
      %s36 = ssub.s32 %s30, 2
      %s43 = sadd.s32 1, %s38
      %p44 = scmp.ge.s32.totalorder %s43, 4
      %s45 = scalar_select %p44, 0, %s43
      %s46 = sadd.s32 1, %s37
      %s47 = scalar_select %p44, %s46, %s37
      %p48 = scmp.ge.s32.totalorder %s47, 2
      %s49 = scalar_select %p48, 0, %s47
      %s50 = ssub.s32 %s37, %s49
      %p51 = scmp.eq.s32.totalorder %s50, 0
      %s53 = sadd.s32 %s52, 1
      %s54 = scalar_select %p51, %s52, %s53
      %p57 = pneg %p51
      %p58 = scmp.eq.s32.totalorder %s30, 7
      %p59 = por %p57, %p58
      %p60 = scmp.ne.s32.totalorder %s52, %s55
      %p61 = scmp.eq.s32.totalorder %s30, 0
      %p62 = por %p60, %p61
      %p63 = scmp.ne.s32.totalorder %s52, %s55
      %p64 = scmp.eq.s32.totalorder %s35, 7
      %p65 = por %p63, %p64
      %p66 = scmp.ne.s32.totalorder %s55, %s56
      %p67 = scmp.eq.s32.totalorder %s35, 0
      %p68 = por %p66, %p67
      %p69 = scmp.ne.s32.totalorder %s55, %s56
      %p70 = scmp.eq.s32.totalorder %s36, 7
      %p71 = por %p69, %p70
      %p73 = scmp.ne.s32.totalorder %s56, %s72
      %p74 = scmp.eq.s32.totalorder %s36, 0
      %p75 = por %p73, %p74
      %s77 = sadd.s32 %s76, 1
      %p80 = scmp.eq.s32.totalorder %s30, 7
      %p81 = scmp.ne.s32.totalorder %s76, %s78
      %p82 = scmp.eq.s32.totalorder %s30, 0
      %p83 = por %p81, %p82
      %p84 = scmp.ne.s32.totalorder %s76, %s78
      %p85 = scmp.eq.s32.totalorder %s35, 7
      %p86 = por %p84, %p85
      %p87 = scmp.ne.s32.totalorder %s78, %s79
      %p88 = scmp.eq.s32.totalorder %s35, 0
      %p89 = por %p87, %p88
      %p90 = scmp.ne.s32.totalorder %s78, %s79
      %p91 = scmp.eq.s32.totalorder %s36, 7
      %p92 = por %p90, %p91
      %p94 = scmp.ne.s32.totalorder %s79, %s93
      %p95 = scmp.eq.s32.totalorder %s36, 0
      %p96 = por %p94, %p95
      %s98 = sadd.s32 %s97, 1
      %p101 = scmp.eq.s32.totalorder %s30, 7
      %p102 = scmp.ne.s32.totalorder %s97, %s99
      %p103 = scmp.eq.s32.totalorder %s30, 0
      %p104 = por %p102, %p103
      %p105 = scmp.ne.s32.totalorder %s97, %s99
      %p106 = scmp.eq.s32.totalorder %s35, 7
      %p107 = por %p105, %p106
      %p108 = scmp.ne.s32.totalorder %s99, %s100
      %p109 = scmp.eq.s32.totalorder %s35, 0
      %p110 = por %p108, %p109
      %p111 = scmp.ne.s32.totalorder %s99, %s100
      %p112 = scmp.eq.s32.totalorder %s36, 7
      %p113 = por %p111, %p112
      %p115 = scmp.ne.s32.totalorder %s100, %s114
      %p116 = scmp.eq.s32.totalorder %s36, 0
      %p117 = por %p115, %p116
      %s119 = sadd.s32 %s118, 1
      %p122 = scmp.eq.s32.totalorder %s30, 7
      %p123 = scmp.ne.s32.totalorder %s118, %s120
      %p124 = scmp.eq.s32.totalorder %s30, 0
      %p125 = por %p123, %p124
      %p126 = scmp.ne.s32.totalorder %s118, %s120
      %p127 = scmp.eq.s32.totalorder %s35, 7
      %p128 = por %p126, %p127
      %p129 = scmp.ne.s32.totalorder %s120, %s121
      %p130 = scmp.eq.s32.totalorder %s35, 0
      %p131 = por %p129, %p130
      %p132 = scmp.ne.s32.totalorder %s120, %s121
      %p133 = scmp.eq.s32.totalorder %s36, 7
      %p134 = por %p132, %p133
      %p136 = scmp.ne.s32.totalorder %s121, %s135
      %p137 = scmp.eq.s32.totalorder %s36, 0
      %p138 = por %p136, %p137
      %s140 = sadd.s32 %s139, 1
      %p143 = scmp.eq.s32.totalorder %s30, 7
      %p144 = scmp.ne.s32.totalorder %s139, %s141
      %p145 = scmp.eq.s32.totalorder %s30, 0
      %p146 = por %p144, %p145
      %p147 = scmp.ne.s32.totalorder %s139, %s141
      %p148 = scmp.eq.s32.totalorder %s35, 7
      %p149 = por %p147, %p148
      %p150 = scmp.ne.s32.totalorder %s141, %s142
      %p151 = scmp.eq.s32.totalorder %s35, 0
      %p152 = por %p150, %p151
      %p153 = scmp.ne.s32.totalorder %s141, %s142
      %p154 = scmp.eq.s32.totalorder %s36, 7
      %p155 = por %p153, %p154
      %p157 = scmp.ne.s32.totalorder %s142, %s156
      %p158 = scmp.eq.s32.totalorder %s36, 0
      %p159 = por %p157, %p158
      %s161 = sadd.s32 %s160, 1
      %p164 = scmp.eq.s32.totalorder %s30, 7
      %p165 = scmp.ne.s32.totalorder %s160, %s162
      %p166 = scmp.eq.s32.totalorder %s30, 0
      %p167 = por %p165, %p166
      %p168 = scmp.ne.s32.totalorder %s160, %s162
      %p169 = scmp.eq.s32.totalorder %s35, 7
      %p170 = por %p168, %p169
      %p171 = scmp.ne.s32.totalorder %s162, %s163
      %p172 = scmp.eq.s32.totalorder %s35, 0
      %p173 = por %p171, %p172
      %p174 = scmp.ne.s32.totalorder %s162, %s163
      %p175 = scmp.eq.s32.totalorder %s36, 7
      %p176 = por %p174, %p175
      %p178 = scmp.ne.s32.totalorder %s163, %s177
      %p179 = scmp.eq.s32.totalorder %s36, 0
      %p180 = por %p178, %p179
      %s182 = sadd.s32 %s181, 1
      %p185 = scmp.eq.s32.totalorder %s30, 7
      %p186 = scmp.ne.s32.totalorder %s181, %s183
      %p187 = scmp.eq.s32.totalorder %s30, 0
      %p188 = por %p186, %p187
      %p189 = scmp.ne.s32.totalorder %s181, %s183
      %p190 = scmp.eq.s32.totalorder %s35, 7
      %p191 = por %p189, %p190
      %p192 = scmp.ne.s32.totalorder %s183, %s184
      %p193 = scmp.eq.s32.totalorder %s35, 0
      %p194 = por %p192, %p193
      %p195 = scmp.ne.s32.totalorder %s183, %s184
      %p196 = scmp.eq.s32.totalorder %s36, 7
      %p197 = por %p195, %p196
      %p199 = scmp.ne.s32.totalorder %s184, %s198
      %p200 = scmp.eq.s32.totalorder %s36, 0
      %p201 = por %p199, %p200
      %s203 = sadd.s32 %s202, 1
      %p206 = scmp.eq.s32.totalorder %s30, 7
      %p207 = scmp.ne.s32.totalorder %s202, %s204
      %p208 = scmp.eq.s32.totalorder %s30, 0
      %p209 = por %p207, %p208
      %p210 = scmp.ne.s32.totalorder %s202, %s204
      %p211 = scmp.eq.s32.totalorder %s35, 7
      %p212 = por %p210, %p211
      %p213 = scmp.ne.s32.totalorder %s204, %s205
      %p214 = scmp.eq.s32.totalorder %s35, 0
      %p215 = por %p213, %p214
      %p216 = scmp.ne.s32.totalorder %s204, %s205
      %p217 = scmp.eq.s32.totalorder %s36, 7
      %p218 = por %p216, %p217
      %p220 = scmp.ne.s32.totalorder %s205, %s219
      %p221 = scmp.eq.s32.totalorder %s36, 0
      %p222 = por %p220, %p221
      %s224 = sadd.s32 %s223, 1
      %p227 = scmp.eq.s32.totalorder %s30, 7
      %p228 = scmp.ne.s32.totalorder %s223, %s225
      %p229 = scmp.eq.s32.totalorder %s30, 0
      %p230 = por %p228, %p229
      %p231 = scmp.ne.s32.totalorder %s223, %s225
      %p232 = scmp.eq.s32.totalorder %s35, 7
      %p233 = por %p231, %p232
      %p234 = scmp.ne.s32.totalorder %s225, %s226
      %p235 = scmp.eq.s32.totalorder %s35, 0
      %p236 = por %p234, %p235
      %p237 = scmp.ne.s32.totalorder %s225, %s226
      %p238 = scmp.eq.s32.totalorder %s36, 7
      %p239 = por %p237, %p238
      %p241 = scmp.ne.s32.totalorder %s226, %s240
      %p242 = scmp.eq.s32.totalorder %s36, 0
      %p243 = por %p241, %p242
      %s245 = sadd.s32 %s244, 1
      %p248 = scmp.eq.s32.totalorder %s30, 7
      %p249 = scmp.ne.s32.totalorder %s244, %s246
      %p250 = scmp.eq.s32.totalorder %s30, 0
      %p251 = por %p249, %p250
      %p252 = scmp.ne.s32.totalorder %s244, %s246
      %p253 = scmp.eq.s32.totalorder %s35, 7
      %p254 = por %p252, %p253
      %p255 = scmp.ne.s32.totalorder %s246, %s247
      %p256 = scmp.eq.s32.totalorder %s35, 0
      %p257 = por %p255, %p256
      %p258 = scmp.ne.s32.totalorder %s246, %s247
      %p259 = scmp.eq.s32.totalorder %s36, 7
      %p260 = por %p258, %p259
      %p262 = scmp.ne.s32.totalorder %s247, %s261
      %p263 = scmp.eq.s32.totalorder %s36, 0
      %p264 = por %p262, %p263
      %s266 = sadd.s32 %s265, 1
      %p269 = scmp.eq.s32.totalorder %s30, 7
      %p270 = scmp.ne.s32.totalorder %s265, %s267
      %p271 = scmp.eq.s32.totalorder %s30, 0
      %p272 = por %p270, %p271
      %p273 = scmp.ne.s32.totalorder %s265, %s267
      %p274 = scmp.eq.s32.totalorder %s35, 7
      %p275 = por %p273, %p274
      %p276 = scmp.ne.s32.totalorder %s267, %s268
      %p277 = scmp.eq.s32.totalorder %s35, 0
      %p278 = por %p276, %p277
      %p279 = scmp.ne.s32.totalorder %s267, %s268
      %p280 = scmp.eq.s32.totalorder %s36, 7
      %p281 = por %p279, %p280
      %p283 = scmp.ne.s32.totalorder %s268, %s282
      %p284 = scmp.eq.s32.totalorder %s36, 0
      %p285 = por %p283, %p284
      %s287 = sadd.s32 %s286, 1
      %p290 = scmp.eq.s32.totalorder %s30, 7
      %p291 = scmp.ne.s32.totalorder %s286, %s288
      %p292 = scmp.eq.s32.totalorder %s30, 0
      %p293 = por %p291, %p292
      %p294 = scmp.ne.s32.totalorder %s286, %s288
      %p295 = scmp.eq.s32.totalorder %s35, 7
      %p296 = por %p294, %p295
      %p297 = scmp.ne.s32.totalorder %s288, %s289
      %p298 = scmp.eq.s32.totalorder %s35, 0
      %p299 = por %p297, %p298
      %p300 = scmp.ne.s32.totalorder %s288, %s289
      %p301 = scmp.eq.s32.totalorder %s36, 7
      %p302 = por %p300, %p301
      %p304 = scmp.ne.s32.totalorder %s289, %s303
      %p305 = scmp.eq.s32.totalorder %s36, 0
      %p306 = por %p304, %p305
      %s308 = sadd.s32 %s307, 1
      %p311 = scmp.eq.s32.totalorder %s30, 7
      %p312 = scmp.ne.s32.totalorder %s307, %s309
      %p313 = scmp.eq.s32.totalorder %s30, 0
      %p314 = por %p312, %p313
      %p315 = scmp.ne.s32.totalorder %s307, %s309
      %p316 = scmp.eq.s32.totalorder %s35, 7
      %p317 = por %p315, %p316
      %p318 = scmp.ne.s32.totalorder %s309, %s310
      %p319 = scmp.eq.s32.totalorder %s35, 0
      %p320 = por %p318, %p319
      %p321 = scmp.ne.s32.totalorder %s309, %s310
      %p322 = scmp.eq.s32.totalorder %s36, 7
      %p323 = por %p321, %p322
      %p325 = scmp.ne.s32.totalorder %s310, %s324
      %p326 = scmp.eq.s32.totalorder %s36, 0
      %p327 = por %p325, %p326
      %s329 = sadd.s32 %s328, 1
      %p332 = scmp.eq.s32.totalorder %s30, 7
      %p333 = scmp.ne.s32.totalorder %s328, %s330
      %p334 = scmp.eq.s32.totalorder %s30, 0
      %p335 = por %p333, %p334
      %p336 = scmp.ne.s32.totalorder %s328, %s330
      %p337 = scmp.eq.s32.totalorder %s35, 7
      %p338 = por %p336, %p337
      %p339 = scmp.ne.s32.totalorder %s330, %s331
      %p340 = scmp.eq.s32.totalorder %s35, 0
      %p341 = por %p339, %p340
      %p342 = scmp.ne.s32.totalorder %s330, %s331
      %p343 = scmp.eq.s32.totalorder %s36, 7
      %p344 = por %p342, %p343
      %p346 = scmp.ne.s32.totalorder %s331, %s345
      %p347 = scmp.eq.s32.totalorder %s36, 0
      %p348 = por %p346, %p347
      %s350 = sadd.s32 %s349, 1
      %p353 = scmp.eq.s32.totalorder %s30, 7
      %p354 = scmp.ne.s32.totalorder %s349, %s351
      %p355 = scmp.eq.s32.totalorder %s30, 0
      %p356 = por %p354, %p355
      %p357 = scmp.ne.s32.totalorder %s349, %s351
      %p358 = scmp.eq.s32.totalorder %s35, 7
      %p359 = por %p357, %p358
      %p360 = scmp.ne.s32.totalorder %s351, %s352
      %p361 = scmp.eq.s32.totalorder %s35, 0
      %p362 = por %p360, %p361
      %p363 = scmp.ne.s32.totalorder %s351, %s352
      %p364 = scmp.eq.s32.totalorder %s36, 7
      %p365 = por %p363, %p364
      %p367 = scmp.ne.s32.totalorder %s352, %s366
      %p368 = scmp.eq.s32.totalorder %s36, 0
      %p369 = por %p367, %p368
      %s370 = ssub.s32 %s37, %s49
      %s371 = ssub.s32 %s38, %s45
      %s372 = sor.u32 %s370, %s371
      %p373 = scmp.eq.s32.totalorder %s372, 0
      %s375 = sadd.s32 %s374, 1
      %s376 = scalar_select %p373, %s374, %s375
      %p379 = pneg %p373
      %p380 = scmp.eq.s32.totalorder %s30, 7
      %p381 = por %p379, %p380
      %p382 = scmp.ne.s32.totalorder %s374, %s377
      %p383 = scmp.eq.s32.totalorder %s30, 0
      %p384 = por %p382, %p383
      %p385 = scmp.ne.s32.totalorder %s374, %s377
      %p386 = scmp.eq.s32.totalorder %s35, 7
      %p387 = por %p385, %p386
      %p388 = scmp.ne.s32.totalorder %s377, %s378
      %p389 = scmp.eq.s32.totalorder %s35, 0
      %p390 = por %p388, %p389
      %p391 = scmp.ne.s32.totalorder %s377, %s378
      %p392 = scmp.eq.s32.totalorder %s36, 7
      %p393 = por %p391, %p392
      %p395 = scmp.ne.s32.totalorder %s378, %s394
      %p396 = scmp.eq.s32.totalorder %s36, 0
      %p397 = por %p395, %p396
      %p398 = scmp.le.s32.totalorder 1, %s30
      %p399 = scmp.lt.s32.totalorder %s30, 9
      %p400 = pnand %p398, %p399
      %p401 = pneg %p400
      // Predicated region
      $region9: #{tpu_custom_call.1} parent=5 // pred_check
        _
      $region10: #{tpu_custom_call.1} parent=5 // pred_check_branch
        %403 = sbr.rel (%p400) target = $region12
      $region11: #{tpu_custom_call.1} parent=5 // pred_region
        %s404 = ssub.s32 %s30, 1
        // Predicated region
        $region13: #{tpu_custom_call.1} parent=11 // pred_check
          %p405 = pneg %p89
        $region14: #{tpu_custom_call.1} parent=11 // pred_check_branch
          %407 = sbr.rel (%p405) target = $region16
        $region15: #{tpu_custom_call.1} parent=11 // pred_region
          %s409 = ssub.s32 2048, 2048
          %410 = vsyncadd [#allocation9], %s409
          %s411 = sshll.u32 [#allocation8], 4
          %s412 = int_to_ptr.vmem [resolvable:$true] %s411
          %417 = dma.hbm_to_vmem [thread:$0]  %s1, 2048, %s412, [#allocation9], 128, 128, 8
        $region16: #{tpu_custom_call.1} parent=11 // pred_fallthru
          _
        // Predicated region
        $region17: #{tpu_custom_call.1} parent=11 // pred_check
          %p418 = pneg %p110
        $region18: #{tpu_custom_call.1} parent=11 // pred_check_branch
          %420 = sbr.rel (%p418) target = $region20
        $region19: #{tpu_custom_call.1} parent=11 // pred_region
          _
        $region20: #{tpu_custom_call.1} parent=11 // pred_fallthru
          _
        // Predicated region
        $region21: #{tpu_custom_call.1} parent=11 // pred_check
          %p421 = pneg %p131
        $region22: #{tpu_custom_call.1} parent=11 // pred_check_branch
          %423 = sbr.rel (%p421) target = $region24
        $region23: #{tpu_custom_call.1} parent=11 // pred_region
          %s425 = ssub.s32 4096, 4096
          %426 = vsyncadd [#allocation9], %s425
          %s427 = sshll.u32 [#allocation10], 4
          %s428 = int_to_ptr.vmem [resolvable:$true] %s427
          %433 = dma.hbm_to_vmem [thread:$0]  %s3, 4096, %s428, [#allocation9], 256, 256, 16
        $region24: #{tpu_custom_call.1} parent=11 // pred_fallthru
          _
        // Predicated region
        $region25: #{tpu_custom_call.1} parent=11 // pred_check
          %p434 = pneg %p152
        $region26: #{tpu_custom_call.1} parent=11 // pred_check_branch
          %436 = sbr.rel (%p434) target = $region28
        $region27: #{tpu_custom_call.1} parent=11 // pred_region
          _
        $region28: #{tpu_custom_call.1} parent=11 // pred_fallthru
          _
        // Predicated region
        $region29: #{tpu_custom_call.1} parent=11 // pred_check
          %p437 = pneg %p173
        $region30: #{tpu_custom_call.1} parent=11 // pred_check_branch
          %439 = sbr.rel (%p437) target = $region32
        $region31: #{tpu_custom_call.1} parent=11 // pred_region
          %s441 = ssub.s32 2048, 2048
          %442 = vsyncadd [#allocation12], %s441
          %s443 = sshll.u32 [#allocation11], 4
          %s444 = int_to_ptr.vmem [resolvable:$true] %s443
          %449 = dma.hbm_to_vmem [thread:$0]  %s5, 2048, %s444, [#allocation12], 128, 128, 8
        $region32: #{tpu_custom_call.1} parent=11 // pred_fallthru
          _
        // Predicated region
        $region33: #{tpu_custom_call.1} parent=11 // pred_check
          %p450 = pneg %p194
        $region34: #{tpu_custom_call.1} parent=11 // pred_check_branch
          %452 = sbr.rel (%p450) target = $region36
        $region35: #{tpu_custom_call.1} parent=11 // pred_region
          _
        $region36: #{tpu_custom_call.1} parent=11 // pred_fallthru
          _
        // Predicated region
        $region37: #{tpu_custom_call.1} parent=11 // pred_check
          %p453 = pneg %p215
        $region38: #{tpu_custom_call.1} parent=11 // pred_check_branch
          %455 = sbr.rel (%p453) target = $region40
        $region39: #{tpu_custom_call.1} parent=11 // pred_region
          _
        $region40: #{tpu_custom_call.1} parent=11 // pred_fallthru
          _
        // Predicated region
        $region41: #{tpu_custom_call.1} parent=11 // pred_check
          %p456 = pneg %p236
        $region42: #{tpu_custom_call.1} parent=11 // pred_check_branch
          %458 = sbr.rel (%p456) target = $region44
        $region43: #{tpu_custom_call.1} parent=11 // pred_region
          _
        $region44: #{tpu_custom_call.1} parent=11 // pred_fallthru
          _
        // Predicated region
        $region45: #{tpu_custom_call.1} parent=11 // pred_check
          %p459 = pneg %p257
        $region46: #{tpu_custom_call.1} parent=11 // pred_check_branch
          %461 = sbr.rel (%p459) target = $region48
        $region47: #{tpu_custom_call.1} parent=11 // pred_region
          %s463 = ssub.s32 4096, 4096
          %464 = vsyncadd [#allocation12], %s463
          %s465 = sshll.u32 [#allocation13], 4
          %s466 = int_to_ptr.vmem [resolvable:$true] %s465
          %471 = dma.hbm_to_vmem [thread:$0]  %s9, 4096, %s466, [#allocation12], 256, 256, 16
        $region48: #{tpu_custom_call.1} parent=11 // pred_fallthru
          _
        // Predicated region
        $region49: #{tpu_custom_call.1} parent=11 // pred_check
          %p472 = pneg %p278
        $region50: #{tpu_custom_call.1} parent=11 // pred_check_branch
          %474 = sbr.rel (%p472) target = $region52
        $region51: #{tpu_custom_call.1} parent=11 // pred_region
          _
        $region52: #{tpu_custom_call.1} parent=11 // pred_fallthru
          _
        // Predicated region
        $region53: #{tpu_custom_call.1} parent=11 // pred_check
          %p475 = pneg %p299
        $region54: #{tpu_custom_call.1} parent=11 // pred_check_branch
          %477 = sbr.rel (%p475) target = $region56
        $region55: #{tpu_custom_call.1} parent=11 // pred_region
          %s479 = ssub.s32 4096, 4096
          %480 = vsyncadd [#allocation15], %s479
          %s481 = sshll.u32 [#allocation14], 4
          %s482 = int_to_ptr.vmem [resolvable:$true] %s481
          %487 = dma.hbm_to_vmem [thread:$0]  %s11, 4096, %s482, [#allocation15], 128, 128, 8
        $region56: #{tpu_custom_call.1} parent=11 // pred_fallthru
          _
        // Predicated region
        $region57: #{tpu_custom_call.1} parent=11 // pred_check
          %p488 = pneg %p320
        $region58: #{tpu_custom_call.1} parent=11 // pred_check_branch
          %490 = sbr.rel (%p488) target = $region60
        $region59: #{tpu_custom_call.1} parent=11 // pred_region
          _
        $region60: #{tpu_custom_call.1} parent=11 // pred_fallthru
          _
        // Predicated region
        $region61: #{tpu_custom_call.1} parent=11 // pred_check
          %p491 = pneg %p341
        $region62: #{tpu_custom_call.1} parent=11 // pred_check_branch
          %493 = sbr.rel (%p491) target = $region64
        $region63: #{tpu_custom_call.1} parent=11 // pred_region
          _
        $region64: #{tpu_custom_call.1} parent=11 // pred_fallthru
          _
        // Predicated region
        $region65: #{tpu_custom_call.1} parent=11 // pred_check
          %p494 = pneg %p362
        $region66: #{tpu_custom_call.1} parent=11 // pred_check_branch
          %496 = sbr.rel (%p494) target = $region68
        $region67: #{tpu_custom_call.1} parent=11 // pred_region
          _
        $region68: #{tpu_custom_call.1} parent=11 // pred_fallthru
          _
      $region12: #{tpu_custom_call.1} parent=5 // pred_fallthru
        _
      %p497 = scmp.lt.s32.totalorder %s30, 8
      // Predicated region
      $region69: #{tpu_custom_call.1} parent=5 // pred_check
        %p498 = pneg %p497
      $region70: #{tpu_custom_call.1} parent=5 // pred_check_branch
        %500 = sbr.rel (%p498) target = $region72
      $region71: #{tpu_custom_call.1} parent=5 // pred_region
        // Predicated region
        $region73: #{tpu_custom_call.1} parent=71 // pred_check
          %p501 = pneg %p62
        $region74: #{tpu_custom_call.1} parent=71 // pred_check_branch
          %503 = sbr.rel (%p501) target = $region76
        $region75: #{tpu_custom_call.1} parent=71 // pred_region
          %s504 = sand.u32 %s52, 1
          %s505 = scalar_lea.sflag [#allocation6], %s504
          %s506 = sand.u32 %s52, 1
          %s507 = smul.addr %s506, 64
          %s508 = scalar_lea.vmem [#allocation5], %s507
          %s510 = ssub.s32 1024, 1024
          %511 = vsyncadd %s505, %s510
          %s512 = smul.addr %s37, 8
          %s513 = smul.addr %s512, 128
          %s514 = scalar_lea.hbm %s0, %s513
          %s515 = sshll.u32 %s508, 4
          %s516 = int_to_ptr.vmem [resolvable:$true] %s515
          %521 = dma.hbm_to_vmem [thread:$0]  %s514, 1024, %s516, %s505, 128, 128, 8
        $region76: #{tpu_custom_call.1} parent=71 // pred_fallthru
          _
      $region72: #{tpu_custom_call.1} parent=5 // pred_fallthru
        _
      %p522 = scmp.le.s32.totalorder 1, %s30
      %p523 = scmp.lt.s32.totalorder %s30, 9
      %p524 = pnand %p522, %p523
      %p525 = pneg %p524
      // Predicated region
      $region77: #{tpu_custom_call.1} parent=5 // pred_check
        _
      $region78: #{tpu_custom_call.1} parent=5 // pred_check_branch
        %527 = sbr.rel (%p524) target = $region80
      $region79: #{tpu_custom_call.1} parent=5 // pred_region
        %s528 = ssub.s32 %s30, 1
        %s529 = sand.u32 %s55, 1
        %s530 = scalar_lea.sflag [#allocation6], %s529
        %s531 = sand.u32 %s55, 1
        %s532 = smul.addr %s531, 64
        %s533 = scalar_lea.vmem [#allocation5], %s532
        // Predicated region
        $region81: #{tpu_custom_call.1} parent=79 // pred_check
          %p534 = pneg %p68
        $region82: #{tpu_custom_call.1} parent=79 // pred_check_branch
          %536 = sbr.rel (%p534) target = $region84
        $region83: #{tpu_custom_call.1} parent=79 // pred_region
          %537 = dma.done %s530, 1024
        $region84: #{tpu_custom_call.1} parent=79 // pred_fallthru
          _
        // Predicated region
        $region85: #{tpu_custom_call.1} parent=79 // pred_check
          %p538 = pneg %p89
        $region86: #{tpu_custom_call.1} parent=79 // pred_check_branch
          %540 = sbr.rel (%p538) target = $region88
        $region87: #{tpu_custom_call.1} parent=79 // pred_region
          %541 = dma.done [#allocation9], 2048
        $region88: #{tpu_custom_call.1} parent=79 // pred_fallthru
          _
        // Predicated region
        $region89: #{tpu_custom_call.1} parent=79 // pred_check
          %p542 = pneg %p131
        $region90: #{tpu_custom_call.1} parent=79 // pred_check_branch
          %544 = sbr.rel (%p542) target = $region92
        $region91: #{tpu_custom_call.1} parent=79 // pred_region
          %545 = dma.done [#allocation9], 4096
        $region92: #{tpu_custom_call.1} parent=79 // pred_fallthru
          _
        // Predicated region
        $region93: #{tpu_custom_call.1} parent=79 // pred_check
          %p546 = pneg %p173
        $region94: #{tpu_custom_call.1} parent=79 // pred_check_branch
          %548 = sbr.rel (%p546) target = $region96
        $region95: #{tpu_custom_call.1} parent=79 // pred_region
          %549 = dma.done [#allocation12], 2048
        $region96: #{tpu_custom_call.1} parent=79 // pred_fallthru
          _
        // Predicated region
        $region97: #{tpu_custom_call.1} parent=79 // pred_check
          %p550 = pneg %p257
        $region98: #{tpu_custom_call.1} parent=79 // pred_check_branch
          %552 = sbr.rel (%p550) target = $region100
        $region99: #{tpu_custom_call.1} parent=79 // pred_region
          %553 = dma.done [#allocation12], 4096
        $region100: #{tpu_custom_call.1} parent=79 // pred_fallthru
          _
        // Predicated region
        $region101: #{tpu_custom_call.1} parent=79 // pred_check
          %p554 = pneg %p299
        $region102: #{tpu_custom_call.1} parent=79 // pred_check_branch
          %556 = sbr.rel (%p554) target = $region104
        $region103: #{tpu_custom_call.1} parent=79 // pred_region
          %557 = dma.done [#allocation15], 4096
        $region104: #{tpu_custom_call.1} parent=79 // pred_fallthru
          _
        %s558 = sand.u32 %s55, 1
        %s559 = scalar_lea.sflag [#allocation6], %s558
        %s560 = sand.u32 %s55, 1
        %s561 = smul.addr %s560, 64
        %s562 = scalar_lea.vmem [#allocation5], %s561
        %p563 = pneg %p68
        %p564 = pneg %p65
        %p565 = pneg %p89
        %p566 = pneg %p86
        %p567 = pneg %p110
        %p568 = pneg %p107
        %p569 = pneg %p131
        %p570 = pneg %p128
        %p571 = pneg %p152
        %p572 = pneg %p149
        %p573 = pneg %p173
        %p574 = pneg %p170
        %p575 = pneg %p194
        %p576 = pneg %p191
        %p577 = pneg %p215
        %p578 = pneg %p212
        %p579 = pneg %p236
        %p580 = pneg %p233
        %p581 = pneg %p257
        %p582 = pneg %p254
        %p583 = pneg %p278
        %p584 = pneg %p275
        %p585 = pneg %p299
        %p586 = pneg %p296
        %p587 = pneg %p320
        %p588 = pneg %p317
        %p589 = pneg %p341
        %p590 = pneg %p338
        %p591 = pneg %p362
        %p592 = pneg %p359
        %p593 = pneg %p390
        %p594 = pneg %p387
        %s595 = sand.u32 %s377, 1
        %s596 = scalar_lea.sflag [#allocation7], %s595
        %s597 = sand.u32 %s377, 1
        %s598 = smul.addr %s597, 16
        %s599 = scalar_lea.vmem [#allocation16], %s598
        %s600 = smul.u32 2, %s40
        %p601 = scmp.eq.s32.totalorder %s40, 0
        // Predicated region
        $region105: #{tpu_custom_call.1} parent=79 // pred_check
          %p602 = pneg %p601
        $region106: #{tpu_custom_call.1} parent=79 // pred_check_branch
          %604 = sbr.rel (%p602) target = $region108
        $region107: #{tpu_custom_call.1} parent=79 // pred_region
          %v605 = vld [vmem:[%s533] sm:$0xff]
          %v606 = vld [vmem:[%s533 + $0x8] sm:$0xff]
          %v607 = vld [vmem:[%s533 + $0x10] sm:$0xff]
          %v608 = vld [vmem:[%s533 + $0x18] sm:$0xff]
          %v609 = vld [vmem:[%s533 + $0x20] sm:$0xff]
          %v610 = vld [vmem:[%s533 + $0x28] sm:$0xff]
          %v611 = vld [vmem:[%s533 + $0x30] sm:$0xff]
          %v612 = vld [vmem:[%s533 + $0x38] sm:$0xff]
          %v613 = vld [vmem:[#allocation10] sm:$0xff]
          %v614 = vld [vmem:[#allocation10 + $0x8] sm:$0xff]
          %v615 = vld [vmem:[#allocation10 + $0x10] sm:$0xff]
          %v616 = vld [vmem:[#allocation10 + $0x18] sm:$0xff]
          %v617 = vld [vmem:[#allocation10 + $0x20] sm:$0xff]
          %v618 = vld [vmem:[#allocation10 + $0x28] sm:$0xff]
          %v619 = vld [vmem:[#allocation10 + $0x30] sm:$0xff]
          %v620 = vld [vmem:[#allocation10 + $0x38] sm:$0xff]
          %v621 = vld [vmem:[#allocation10 + $0x40] sm:$0xff]
          %v622 = vld [vmem:[#allocation10 + $0x48] sm:$0xff]
          %v623 = vld [vmem:[#allocation10 + $0x50] sm:$0xff]
          %v624 = vld [vmem:[#allocation10 + $0x58] sm:$0xff]
          %v625 = vld [vmem:[#allocation10 + $0x60] sm:$0xff]
          %v626 = vld [vmem:[#allocation10 + $0x68] sm:$0xff]
          %v627 = vld [vmem:[#allocation10 + $0x70] sm:$0xff]
          %v628 = vld [vmem:[#allocation10 + $0x78] sm:$0xff]
          %v629 = vld [vmem:[#allocation10 + $0x80] sm:$0xff]
          %v630 = vld [vmem:[#allocation10 + $0x88] sm:$0xff]
          %v631 = vld [vmem:[#allocation10 + $0x90] sm:$0xff]
          %v632 = vld [vmem:[#allocation10 + $0x98] sm:$0xff]
          %v633 = vld [vmem:[#allocation10 + $0xa0] sm:$0xff]
          %v634 = vld [vmem:[#allocation10 + $0xa8] sm:$0xff]
          %v635 = vld [vmem:[#allocation10 + $0xb0] sm:$0xff]
          %v636 = vld [vmem:[#allocation10 + $0xb8] sm:$0xff]
          %v637 = vld [vmem:[#allocation10 + $0xc0] sm:$0xff]
          %v638 = vld [vmem:[#allocation10 + $0xc8] sm:$0xff]
          %v639 = vld [vmem:[#allocation10 + $0xd0] sm:$0xff]
          %v640 = vld [vmem:[#allocation10 + $0xd8] sm:$0xff]
          %v641 = vld [vmem:[#allocation10 + $0xe0] sm:$0xff]
          %v642 = vld [vmem:[#allocation10 + $0xe8] sm:$0xff]
          %v643 = vld [vmem:[#allocation10 + $0xf0] sm:$0xff]
          %v644 = vld [vmem:[#allocation10 + $0xf8] sm:$0xff]
          %v645 = vld [vmem:[%s4] sm:$0x3]
          %v647 = vlaneseq
          %v648 = vshrl.u32 %v647, 7
          %v649 = vsub.s32 0, %v648
          %v650 = vrot.slane %v645, %v649
          %v651 = vlaneseq
          %v652 = vshrl.u32 %v651, 7
          %v653 = vsub.s32 1, %v652
          %v654 = vrot.slane %v645, %v653
          %657 = vmatprep.subr.mxu0 %v614
          %658 = vmatpush1.msra.mxu0 %v613
          %659 = vmatprep.subr.mxu0 %v616
          %660 = vmatpush1.msra.mxu0 %v615
          %661 = vmatprep.subr.mxu0 %v618
          %662 = vmatpush1.msra.mxu0 %v617
          %663 = vmatprep.subr.mxu0 %v620
          %664 = vmatpush1.msra.mxu0 %v619
          %665 = vmatprep.subr.mxu0 %v622
          %666 = vmatpush1.msra.mxu0 %v621
          %667 = vmatprep.subr.mxu0 %v624
          %668 = vmatpush1.msra.mxu0 %v623
          %669 = vmatprep.subr.mxu0 %v626
          %670 = vmatpush1.msra.mxu0 %v625
          %671 = vmatprep.subr.mxu0 %v628
          %672 = vmatpush1.msra.mxu0 %v627
          %673 = vmatprep.subr.mxu0 %v630
          %674 = vmatpush1.msra.mxu0 %v629
          %675 = vmatprep.subr.mxu0 %v632
          %676 = vmatpush1.msra.mxu0 %v631
          %677 = vmatprep.subr.mxu0 %v634
          %678 = vmatpush1.msra.mxu0 %v633
          %679 = vmatprep.subr.mxu0 %v636
          %680 = vmatpush1.msra.mxu0 %v635
          %681 = vmatprep.subr.mxu0 %v638
          %682 = vmatpush1.msra.mxu0 %v637
          %683 = vmatprep.subr.mxu0 %v640
          %684 = vmatpush1.msra.mxu0 %v639
          %685 = vmatprep.subr.mxu0 %v642
          %686 = vmatpush1.msra.mxu0 %v641
          %687 = vmatprep.subr.mxu0 %v644
          %688 = vmatpush1.msra.mxu0 %v643
          %689 = vmatprep.subr.mxu0 0.0
          %690 = vmatpush1.msra.mxu0 0.0
          %691 = vmatprep.subr.mxu0 0.0
          %692 = vmatpush1.msra.mxu0 0.0
          %693 = vmatprep.subr.mxu0 0.0
          %694 = vmatpush1.msra.mxu0 0.0
          %695 = vmatprep.subr.mxu0 0.0
          %696 = vmatpush1.msra.mxu0 0.0
          %697 = vmatprep.subr.mxu0 0.0
          %698 = vmatpush1.msra.mxu0 0.0
          %699 = vmatprep.subr.mxu0 0.0
          %700 = vmatpush1.msra.mxu0 0.0
          %701 = vmatprep.subr.mxu0 0.0
          %702 = vmatpush1.msra.mxu0 0.0
          %703 = vmatprep.subr.mxu0 0.0
          %704 = vmatpush1.msra.mxu0 0.0
          %705 = vmatprep.subr.mxu0 0.0
          %706 = vmatpush1.msra.mxu0 0.0
          %707 = vmatprep.subr.mxu0 0.0
          %708 = vmatpush1.msra.mxu0 0.0
          %709 = vmatprep.subr.mxu0 0.0
          %710 = vmatpush1.msra.mxu0 0.0
          %711 = vmatprep.subr.mxu0 0.0
          %712 = vmatpush1.msra.mxu0 0.0
          %713 = vmatprep.subr.mxu0 0.0
          %714 = vmatpush1.msra.mxu0 0.0
          %715 = vmatprep.subr.mxu0 0.0
          %716 = vmatpush1.msra.mxu0 0.0
          %717 = vmatprep.subr.mxu0 0.0
          %718 = vmatpush1.msra.mxu0 0.0
          %719 = vmatprep.subr.mxu0 0.0
          %720 = vmatpush1.msra.mxu0 0.0
          %721 = vmatprep.mubr.f32.mxu0 0.0
          %722 = vmatmul.mubr.f32.gmra.mrb[0].mxu0 %v605
          %v723 = vpop.f32.mrb[0].mxu0
          %v724 = vadd.f32 %v650, %v723
          %v725 = vpop.f32.mrb[0].mxu0
          %v726 = vadd.f32 %v654, %v725
          %727 = vmatprep.mubr.f32.mxu0 0.0
          %728 = vmatmul.mubr.f32.gmra.mrb[0].mxu0 %v606
          %v729 = vpop.f32.mrb[0].mxu0
          %v730 = vadd.f32 %v650, %v729
          %v731 = vpop.f32.mrb[0].mxu0
          %v732 = vadd.f32 %v654, %v731
          %733 = vmatprep.mubr.f32.mxu0 0.0
          %734 = vmatmul.mubr.f32.gmra.mrb[0].mxu0 %v607
          %v735 = vpop.f32.mrb[0].mxu0
          %v736 = vadd.f32 %v650, %v735
          %v737 = vpop.f32.mrb[0].mxu0
          %v738 = vadd.f32 %v654, %v737
          %739 = vmatprep.mubr.f32.mxu0 0.0
          %740 = vmatmul.mubr.f32.gmra.mrb[0].mxu0 %v608
          %v741 = vpop.f32.mrb[0].mxu0
          %v742 = vadd.f32 %v650, %v741
          %v743 = vpop.f32.mrb[0].mxu0
          %v744 = vadd.f32 %v654, %v743
          %745 = vmatprep.mubr.f32.mxu0 0.0
          %746 = vmatmul.mubr.f32.gmra.mrb[0].mxu0 %v609
          %v747 = vpop.f32.mrb[0].mxu0
          %v748 = vadd.f32 %v650, %v747
          %v749 = vpop.f32.mrb[0].mxu0
          %v750 = vadd.f32 %v654, %v749
          %751 = vmatprep.mubr.f32.mxu0 0.0
          %752 = vmatmul.mubr.f32.gmra.mrb[0].mxu0 %v610
          %v753 = vpop.f32.mrb[0].mxu0
          %v754 = vadd.f32 %v650, %v753
          %v755 = vpop.f32.mrb[0].mxu0
          %v756 = vadd.f32 %v654, %v755
          %757 = vmatprep.mubr.f32.mxu0 0.0
          %758 = vmatmul.mubr.f32.gmra.mrb[0].mxu0 %v611
          %v759 = vpop.f32.mrb[0].mxu0
          %v760 = vadd.f32 %v650, %v759
          %v761 = vpop.f32.mrb[0].mxu0
          %v762 = vadd.f32 %v654, %v761
          %763 = vmatprep.mubr.f32.mxu0 0.0
          %764 = vmatmul.mubr.f32.gmra.mrb[0].mxu0 %v612
          %v765 = vpop.f32.mrb[0].mxu0
          %v766 = vadd.f32 %v650, %v765
          %v767 = vpop.f32.mrb[0].mxu0
          %v768 = vadd.f32 %v654, %v767
          %769 = vdwg.mxu0
          %770 = vst [vmem:[#allocation2] sm:$0xff] %v724
          %771 = vst [vmem:[#allocation2 + $0x8] sm:$0xff] %v726
          %772 = vst [vmem:[#allocation2 + $0x10] sm:$0xff] %v730
          %773 = vst [vmem:[#allocation2 + $0x18] sm:$0xff] %v732
          %774 = vst [vmem:[#allocation2 + $0x20] sm:$0xff] %v736
          %775 = vst [vmem:[#allocation2 + $0x28] sm:$0xff] %v738
          %776 = vst [vmem:[#allocation2 + $0x30] sm:$0xff] %v742
          %777 = vst [vmem:[#allocation2 + $0x38] sm:$0xff] %v744
          %778 = vst [vmem:[#allocation2 + $0x40] sm:$0xff] %v748
          %779 = vst [vmem:[#allocation2 + $0x48] sm:$0xff] %v750
          %780 = vst [vmem:[#allocation2 + $0x50] sm:$0xff] %v754
          %781 = vst [vmem:[#allocation2 + $0x58] sm:$0xff] %v756
          %782 = vst [vmem:[#allocation2 + $0x60] sm:$0xff] %v760
          %783 = vst [vmem:[#allocation2 + $0x68] sm:$0xff] %v762
          %784 = vst [vmem:[#allocation2 + $0x70] sm:$0xff] %v766
          %785 = vst [vmem:[#allocation2 + $0x78] sm:$0xff] %v768
        $region108: #{tpu_custom_call.1} parent=79 // pred_fallthru
          _
        %s786 = smul.u32 %s40, 16
        %s787 = scalar_lea.vmem %s533, %s786 [#allocation5]
        %v788 = vld [vmem:[%s787] sm:$0xff]
        %v789 = vld [vmem:[%s787 + $0x8] sm:$0xff]
        %v790 = vld [vmem:[#allocation8] sm:$0xff]
        %v791 = vld [vmem:[#allocation8 + $0x8] sm:$0xff]
        %v792 = vld [vmem:[#allocation8 + $0x10] sm:$0xff]
        %v793 = vld [vmem:[#allocation8 + $0x18] sm:$0xff]
        %v794 = vld [vmem:[#allocation8 + $0x20] sm:$0xff]
        %v795 = vld [vmem:[#allocation8 + $0x28] sm:$0xff]
        %v796 = vld [vmem:[#allocation8 + $0x30] sm:$0xff]
        %v797 = vld [vmem:[#allocation8 + $0x38] sm:$0xff]
        %v798 = vld [vmem:[#allocation8 + $0x40] sm:$0xff]
        %v799 = vld [vmem:[#allocation8 + $0x48] sm:$0xff]
        %v800 = vld [vmem:[#allocation8 + $0x50] sm:$0xff]
        %v801 = vld [vmem:[#allocation8 + $0x58] sm:$0xff]
        %v802 = vld [vmem:[#allocation8 + $0x60] sm:$0xff]
        %v803 = vld [vmem:[#allocation8 + $0x68] sm:$0xff]
        %v804 = vld [vmem:[#allocation8 + $0x70] sm:$0xff]
        %v805 = vld [vmem:[#allocation8 + $0x78] sm:$0xff]
        %v806 = vld [vmem:[%s2] sm:$0x1]
        %v808 = vlaneseq
        %v809 = vshrl.u32 %v808, 7
        %v810 = vsub.s32 0, %v809
        %v811 = vrot.slane %v806, %v810
        %813 = vmatprep.subr.mxu0 0.0
        %814 = vmatpush1.msra.mxu0 %v790
        %815 = vmatprep.subr.mxu0 0.0
        %816 = vmatpush1.msra.mxu0 %v791
        %817 = vmatprep.subr.mxu0 0.0
        %818 = vmatpush1.msra.mxu0 %v792
        %819 = vmatprep.subr.mxu0 0.0
        %820 = vmatpush1.msra.mxu0 %v793
        %821 = vmatprep.subr.mxu0 0.0
        %822 = vmatpush1.msra.mxu0 %v794
        %823 = vmatprep.subr.mxu0 0.0
        %824 = vmatpush1.msra.mxu0 %v795
        %825 = vmatprep.subr.mxu0 0.0
        %826 = vmatpush1.msra.mxu0 %v796
        %827 = vmatprep.subr.mxu0 0.0
        %828 = vmatpush1.msra.mxu0 %v797
        %829 = vmatprep.subr.mxu0 0.0
        %830 = vmatpush1.msra.mxu0 %v798
        %831 = vmatprep.subr.mxu0 0.0
        %832 = vmatpush1.msra.mxu0 %v799
        %833 = vmatprep.subr.mxu0 0.0
        %834 = vmatpush1.msra.mxu0 %v800
        %835 = vmatprep.subr.mxu0 0.0
        %836 = vmatpush1.msra.mxu0 %v801
        %837 = vmatprep.subr.mxu0 0.0
        %838 = vmatpush1.msra.mxu0 %v802
        %839 = vmatprep.subr.mxu0 0.0
        %840 = vmatpush1.msra.mxu0 %v803
        %841 = vmatprep.subr.mxu0 0.0
        %842 = vmatpush1.msra.mxu0 %v804
        %843 = vmatprep.subr.mxu0 0.0
        %844 = vmatpush1.msra.mxu0 %v805
        %845 = vmatprep.subr.mxu0 0.0
        %846 = vmatpush1.msra.mxu0 0.0
        %847 = vmatprep.subr.mxu0 0.0
        %848 = vmatpush1.msra.mxu0 0.0
        %849 = vmatprep.subr.mxu0 0.0
        %850 = vmatpush1.msra.mxu0 0.0
        %851 = vmatprep.subr.mxu0 0.0
        %852 = vmatpush1.msra.mxu0 0.0
        %853 = vmatprep.subr.mxu0 0.0
        %854 = vmatpush1.msra.mxu0 0.0
        %855 = vmatprep.subr.mxu0 0.0
        %856 = vmatpush1.msra.mxu0 0.0
        %857 = vmatprep.subr.mxu0 0.0
        %858 = vmatpush1.msra.mxu0 0.0
        %859 = vmatprep.subr.mxu0 0.0
        %860 = vmatpush1.msra.mxu0 0.0
        %861 = vmatprep.subr.mxu0 0.0
        %862 = vmatpush1.msra.mxu0 0.0
        %863 = vmatprep.subr.mxu0 0.0
        %864 = vmatpush1.msra.mxu0 0.0
        %865 = vmatprep.subr.mxu0 0.0
        %866 = vmatpush1.msra.mxu0 0.0
        %867 = vmatprep.subr.mxu0 0.0
        %868 = vmatpush1.msra.mxu0 0.0
        %869 = vmatprep.subr.mxu0 0.0
        %870 = vmatpush1.msra.mxu0 0.0
        %871 = vmatprep.subr.mxu0 0.0
        %872 = vmatpush1.msra.mxu0 0.0
        %873 = vmatprep.subr.mxu0 0.0
        %874 = vmatpush1.msra.mxu0 0.0
        %875 = vmatprep.subr.mxu0 0.0
        %876 = vmatpush1.msra.mxu0 0.0
        %877 = vmatprep.mubr.f32.mxu0 0.0
        %878 = vmatmul.mubr.f32.gmra.mrb[0].mxu0 %v788
        %v879 = vpop.f32.mrb[0].mxu0
        %v880 = vadd.f32 %v811, %v879
        %v881 = vpop.f32.mrb[0].mxu0
        %882 = vmatprep.mubr.f32.mxu0 0.0
        %883 = vmatmul.mubr.f32.gmra.mrb[0].mxu0 %v789
        %v884 = vpop.f32.mrb[0].mxu0
        %v885 = vadd.f32 %v811, %v884
        %v886 = vpop.f32.mrb[0].mxu0
        %887 = vdwg.mxu0
        %888 = vst [vmem:[#allocation3] sm:$0xff] %v880
        %889 = vst [vmem:[#allocation3 + $0x8] sm:$0xff] %v885
        %v890 = vlaneseq
        %v891 = vshrl.u32 %v890, 7
        %v892 = vadd.s32 %v891, 8
        %v893 = vlaneseq
        %v894 = vand.u32 %v893, 127
        %vm895 = vcmp.le.s32.totalorder %v894, %v891
        %vm896 = vcmp.le.s32.totalorder %v894, %v892
        %v897 = vld [vmem:[#allocation3] sm:$0xff]
        %v898 = vld [vmem:[#allocation3 + $0x8] sm:$0xff]
        // While loop
        $region109: #{tpu_custom_call.1} parent=79 // loop_pre_header
          _
        $region110: #{tpu_custom_call.1} parent=79 // loop_header
          %s900 = sphi 0, %s902
          %p901 = scmp.ge.s32.totalorder %s900, %s40
          %v905 = vphi -1e+30, %v1016
          %v906 = vphi -1e+30, %v1017
          %v907 = vphi 0.0, %v1038
          %v908 = vphi 0.0, %v1039
          %v909 = vphi 0.0, %v1123
          %v910 = vphi 0.0, %v1124
        $region111: #{tpu_custom_call.1} parent=79 // loop_header_branch
          %904 = sbr.rel (%p901) target = $region115
        $region112: #{tpu_custom_call.1} parent=79 // loop_body
          %s911 = smul.u32 %s900, 16
          %s912 = sshra.s32 %s911, 3
          %s913 = sand.u32 %s911, 7
          %s914 = smul.u32 %s912, 2
          %s915 = smul.addr %s914, 8
          %s916 = scalar_lea.vmem [#allocation2], %s915
          %v917 = vld [vmem:[%s916] sm:$0xff]
          %v918 = vld [vmem:[%s916 + $0x10] sm:$0xff]
          %v919 = vld [vmem:[%s916 + $0x8] sm:$0xff]
          %v920 = vld [vmem:[%s916 + $0x18] sm:$0xff]
          %vm921 = vcmask 523264
          %v923 = vsel %vm921, %v897, 0
          %v926 = vsel %vm921, %v898, 0
          %v929 = vsel %vm921, %v917, 0
          %v932 = vsel %vm921, %v918, 0
          %934 = vmatprep.subr.mxu0 0.0
          %935 = vmatpush1.xpose.msra.mxu0 %v929
          %936 = vmatprep.subr.mxu0 0.0
          %937 = vmatpush1.xpose.msra.mxu0 %v932
          %938 = vmatprep.subr.mxu0 0.0
          %939 = vmatpush1.xpose.msra.mxu0 0.0
          %940 = vmatprep.subr.mxu0 0.0
          %941 = vmatpush1.xpose.msra.mxu0 0.0
          %942 = vmatprep.subr.mxu0 0.0
          %943 = vmatpush1.xpose.msra.mxu0 0.0
          %944 = vmatprep.subr.mxu0 0.0
          %945 = vmatpush1.xpose.msra.mxu0 0.0
          %946 = vmatprep.subr.mxu0 0.0
          %947 = vmatpush1.xpose.msra.mxu0 0.0
          %948 = vmatprep.subr.mxu0 0.0
          %949 = vmatpush1.xpose.msra.mxu0 0.0
          %950 = vmatprep.subr.mxu0 0.0
          %951 = vmatpush1.xpose.msra.mxu0 0.0
          %952 = vmatprep.subr.mxu0 0.0
          %953 = vmatpush1.xpose.msra.mxu0 0.0
          %954 = vmatprep.subr.mxu0 0.0
          %955 = vmatpush1.xpose.msra.mxu0 0.0
          %956 = vmatprep.subr.mxu0 0.0
          %957 = vmatpush1.xpose.msra.mxu0 0.0
          %958 = vmatprep.subr.mxu0 0.0
          %959 = vmatpush1.xpose.msra.mxu0 0.0
          %960 = vmatprep.subr.mxu0 0.0
          %961 = vmatpush1.xpose.msra.mxu0 0.0
          %962 = vmatprep.subr.mxu0 0.0
          %963 = vmatpush1.xpose.msra.mxu0 0.0
          %964 = vmatprep.subr.mxu0 0.0
          %965 = vmatpush1.xpose.msra.mxu0 0.0
          %966 = vmatprep.subr.mxu0 0.0
          %967 = vmatpush1.xpose.msra.mxu0 0.0
          %968 = vmatprep.subr.mxu0 0.0
          %969 = vmatpush1.xpose.msra.mxu0 0.0
          %970 = vmatprep.subr.mxu0 0.0
          %971 = vmatpush1.xpose.msra.mxu0 0.0
          %972 = vmatprep.subr.mxu0 0.0
          %973 = vmatpush1.xpose.msra.mxu0 0.0
          %974 = vmatprep.subr.mxu0 0.0
          %975 = vmatpush1.xpose.msra.mxu0 0.0
          %976 = vmatprep.subr.mxu0 0.0
          %977 = vmatpush1.xpose.msra.mxu0 0.0
          %978 = vmatprep.subr.mxu0 0.0
          %979 = vmatpush1.xpose.msra.mxu0 0.0
          %980 = vmatprep.subr.mxu0 0.0
          %981 = vmatpush1.xpose.msra.mxu0 0.0
          %982 = vmatprep.subr.mxu0 0.0
          %983 = vmatpush1.xpose.msra.mxu0 0.0
          %984 = vmatprep.subr.mxu0 0.0
          %985 = vmatpush1.xpose.msra.mxu0 0.0
          %986 = vmatprep.subr.mxu0 0.0
          %987 = vmatpush1.xpose.msra.mxu0 0.0
          %988 = vmatprep.subr.mxu0 0.0
          %989 = vmatpush1.xpose.msra.mxu0 0.0
          %990 = vmatprep.subr.mxu0 0.0
          %991 = vmatpush1.xpose.msra.mxu0 0.0
          %992 = vmatprep.subr.mxu0 0.0
          %993 = vmatpush1.xpose.msra.mxu0 0.0
          %994 = vmatprep.subr.mxu0 0.0
          %995 = vmatpush1.xpose.msra.mxu0 0.0
          %996 = vmatprep.subr.mxu0 0.0
          %997 = vmatpush1.xpose.msra.mxu0 0.0
          %998 = vmatprep.mubr.f32.mxu0 0.0
          %999 = vmatmul.mubr.f32.gmra.mrb[0].mxu0 %v923
          %v1000 = vpop.f32.mrb[0].mxu0
          %v1001 = vadd.f32 0.0, %v1000
          %v1002 = vpop.f32.mrb[0].mxu0
          %1003 = vmatprep.mubr.f32.mxu0 0.0
          %1004 = vmatmul.mubr.f32.gmra.mrb[0].mxu0 %v926
          %v1005 = vpop.f32.mrb[0].mxu0
          %v1006 = vadd.f32 0.0, %v1005
          %v1007 = vpop.f32.mrb[0].mxu0
          %1008 = vdwg.mxu0
          %vm1009 = vcmask 130048
          %v1010 = vsel %vm1009, %v1001, -inf
          %1011 = vmax.xlane.f32.xlu0 %v1010
          %v1012 = vpop.xlane.xlu0 %1011
          %v1013 = vsel %vm1009, %v1006, -inf
          %1014 = vmax.xlane.f32.xlu0 %v1013
          %v1015 = vpop.xlane.xlu0 %1014
          %v1016 = vmax.f32 %v905, %v1012
          %v1017 = vmax.f32 %v906, %v1015
          %v1018 = vsub.f32 %v905, %v1016
          %v1019 = vsub.f32 %v906, %v1017
          %v1020 = vmul.f32 %v1018, 1.442695
          %v1021 = vpow.pop %v1020
          %v1022 = vmul.f32 %v1019, 1.442695
          %v1023 = vpow.pop %v1022
          %v1024 = vsub.f32 %v1001, %v1016
          %v1025 = vsub.f32 %v1006, %v1017
          %v1026 = vmul.f32 %v1024, 1.442695
          %v1027 = vpow.pop %v1026
          %v1028 = vmul.f32 %v1025, 1.442695
          %v1029 = vpow.pop %v1028
          %v1030 = vmul.f32 %v1021, %v907
          %v1031 = vmul.f32 %v1023, %v908
          %v1032 = vsel %vm1009, %v1027, 0.0
          %1033 = vadd.xlane.f32.xlu0 %v1032
          %v1034 = vpop.xlane.xlu0 %1033
          %v1035 = vsel %vm1009, %v1029, 0.0
          %1036 = vadd.xlane.f32.xlu0 %v1035
          %v1037 = vpop.xlane.xlu0 %1036
          %v1038 = vadd.f32 %v1030, %v1034
          %v1039 = vadd.f32 %v1031, %v1037
          %v1040 = vmul.f32 %v1021, %v909
          %v1041 = vmul.f32 %v1023, %v910
          %v1043 = vsel %vm1009, %v1027, 0
          %v1046 = vsel %vm1009, %v1029, 0
          %1048 = vmatprep.subr.mxu0 0.0
          %1049 = vmatpush1.msra.mxu0 %v919
          %1050 = vmatprep.subr.mxu0 0.0
          %1051 = vmatpush1.msra.mxu0 %v920
          %1052 = vmatprep.subr.mxu0 0.0
          %1053 = vmatpush1.msra.mxu0 0.0
          %1054 = vmatprep.subr.mxu0 0.0
          %1055 = vmatpush1.msra.mxu0 0.0
          %1056 = vmatprep.subr.mxu0 0.0
          %1057 = vmatpush1.msra.mxu0 0.0
          %1058 = vmatprep.subr.mxu0 0.0
          %1059 = vmatpush1.msra.mxu0 0.0
          %1060 = vmatprep.subr.mxu0 0.0
          %1061 = vmatpush1.msra.mxu0 0.0
          %1062 = vmatprep.subr.mxu0 0.0
          %1063 = vmatpush1.msra.mxu0 0.0
          %1064 = vmatprep.subr.mxu0 0.0
          %1065 = vmatpush1.msra.mxu0 0.0
          %1066 = vmatprep.subr.mxu0 0.0
          %1067 = vmatpush1.msra.mxu0 0.0
          %1068 = vmatprep.subr.mxu0 0.0
          %1069 = vmatpush1.msra.mxu0 0.0
          %1070 = vmatprep.subr.mxu0 0.0
          %1071 = vmatpush1.msra.mxu0 0.0
          %1072 = vmatprep.subr.mxu0 0.0
          %1073 = vmatpush1.msra.mxu0 0.0
          %1074 = vmatprep.subr.mxu0 0.0
          %1075 = vmatpush1.msra.mxu0 0.0
          %1076 = vmatprep.subr.mxu0 0.0
          %1077 = vmatpush1.msra.mxu0 0.0
          %1078 = vmatprep.subr.mxu0 0.0
          %1079 = vmatpush1.msra.mxu0 0.0
          %1080 = vmatprep.subr.mxu0 0.0
          %1081 = vmatpush1.msra.mxu0 0.0
          %1082 = vmatprep.subr.mxu0 0.0
          %1083 = vmatpush1.msra.mxu0 0.0
          %1084 = vmatprep.subr.mxu0 0.0
          %1085 = vmatpush1.msra.mxu0 0.0
          %1086 = vmatprep.subr.mxu0 0.0
          %1087 = vmatpush1.msra.mxu0 0.0
          %1088 = vmatprep.subr.mxu0 0.0
          %1089 = vmatpush1.msra.mxu0 0.0
          %1090 = vmatprep.subr.mxu0 0.0
          %1091 = vmatpush1.msra.mxu0 0.0
          %1092 = vmatprep.subr.mxu0 0.0
          %1093 = vmatpush1.msra.mxu0 0.0
          %1094 = vmatprep.subr.mxu0 0.0
          %1095 = vmatpush1.msra.mxu0 0.0
          %1096 = vmatprep.subr.mxu0 0.0
          %1097 = vmatpush1.msra.mxu0 0.0
          %1098 = vmatprep.subr.mxu0 0.0
          %1099 = vmatpush1.msra.mxu0 0.0
          %1100 = vmatprep.subr.mxu0 0.0
          %1101 = vmatpush1.msra.mxu0 0.0
          %1102 = vmatprep.subr.mxu0 0.0
          %1103 = vmatpush1.msra.mxu0 0.0
          %1104 = vmatprep.subr.mxu0 0.0
          %1105 = vmatpush1.msra.mxu0 0.0
          %1106 = vmatprep.subr.mxu0 0.0
          %1107 = vmatpush1.msra.mxu0 0.0
          %1108 = vmatprep.subr.mxu0 0.0
          %1109 = vmatpush1.msra.mxu0 0.0
          %1110 = vmatprep.subr.mxu0 0.0
          %1111 = vmatpush1.msra.mxu0 0.0
          %1112 = vmatprep.mubr.f32.mxu0 0.0
          %1113 = vmatmul.mubr.f32.gmra.mrb[0].mxu0 %v1043
          %v1114 = vpop.f32.mrb[0].mxu0
          %v1115 = vadd.f32 0.0, %v1114
          %v1116 = vpop.f32.mrb[0].mxu0
          %1117 = vmatprep.mubr.f32.mxu0 0.0
          %1118 = vmatmul.mubr.f32.gmra.mrb[0].mxu0 %v1046
          %v1119 = vpop.f32.mrb[0].mxu0
          %v1120 = vadd.f32 0.0, %v1119
          %v1121 = vpop.f32.mrb[0].mxu0
          %1122 = vdwg.mxu0
          %v1123 = vadd.f32 %v1040, %v1115
          %v1124 = vadd.f32 %v1041, %v1120
        $region113: #{tpu_custom_call.1} parent=79 // loop_footer
          %s902 = sadd.s32 %s900, 1
        $region114: #{tpu_custom_call.1} parent=79 // loop_footer_branch
          %899 = sbr.rel target = $region110
        $region115: #{tpu_custom_call.1} parent=79 // loop_exit
          _
        %s1125 = sshra.s32 %s786, 3
        %s1126 = sand.u32 %s786, 7
        %s1127 = smul.u32 %s1125, 2
        %s1128 = smul.addr %s1127, 8
        %s1129 = scalar_lea.vmem [#allocation2], %s1128
        %v1130 = vld [vmem:[%s1129] sm:$0xff]
        %v1131 = vld [vmem:[%s1129 + $0x10] sm:$0xff]
        %v1132 = vld [vmem:[%s1129 + $0x8] sm:$0xff]
        %v1133 = vld [vmem:[%s1129 + $0x18] sm:$0xff]
        %vm1134 = vcmask 523264
        %v1136 = vsel %vm1134, %v897, 0
        %v1139 = vsel %vm1134, %v898, 0
        %v1142 = vsel %vm1134, %v1130, 0
        %v1145 = vsel %vm1134, %v1131, 0
        %1147 = vmatprep.subr.mxu0 0.0
        %1148 = vmatpush1.xpose.msra.mxu0 %v1142
        %1149 = vmatprep.subr.mxu0 0.0
        %1150 = vmatpush1.xpose.msra.mxu0 %v1145
        %1151 = vmatprep.subr.mxu0 0.0
        %1152 = vmatpush1.xpose.msra.mxu0 0.0
        %1153 = vmatprep.subr.mxu0 0.0
        %1154 = vmatpush1.xpose.msra.mxu0 0.0
        %1155 = vmatprep.subr.mxu0 0.0
        %1156 = vmatpush1.xpose.msra.mxu0 0.0
        %1157 = vmatprep.subr.mxu0 0.0
        %1158 = vmatpush1.xpose.msra.mxu0 0.0
        %1159 = vmatprep.subr.mxu0 0.0
        %1160 = vmatpush1.xpose.msra.mxu0 0.0
        %1161 = vmatprep.subr.mxu0 0.0
        %1162 = vmatpush1.xpose.msra.mxu0 0.0
        %1163 = vmatprep.subr.mxu0 0.0
        %1164 = vmatpush1.xpose.msra.mxu0 0.0
        %1165 = vmatprep.subr.mxu0 0.0
        %1166 = vmatpush1.xpose.msra.mxu0 0.0
        %1167 = vmatprep.subr.mxu0 0.0
        %1168 = vmatpush1.xpose.msra.mxu0 0.0
        %1169 = vmatprep.subr.mxu0 0.0
        %1170 = vmatpush1.xpose.msra.mxu0 0.0
        %1171 = vmatprep.subr.mxu0 0.0
        %1172 = vmatpush1.xpose.msra.mxu0 0.0
        %1173 = vmatprep.subr.mxu0 0.0
        %1174 = vmatpush1.xpose.msra.mxu0 0.0
        %1175 = vmatprep.subr.mxu0 0.0
        %1176 = vmatpush1.xpose.msra.mxu0 0.0
        %1177 = vmatprep.subr.mxu0 0.0
        %1178 = vmatpush1.xpose.msra.mxu0 0.0
        %1179 = vmatprep.subr.mxu0 0.0
        %1180 = vmatpush1.xpose.msra.mxu0 0.0
        %1181 = vmatprep.subr.mxu0 0.0
        %1182 = vmatpush1.xpose.msra.mxu0 0.0
        %1183 = vmatprep.subr.mxu0 0.0
        %1184 = vmatpush1.xpose.msra.mxu0 0.0
        %1185 = vmatprep.subr.mxu0 0.0
        %1186 = vmatpush1.xpose.msra.mxu0 0.0
        %1187 = vmatprep.subr.mxu0 0.0
        %1188 = vmatpush1.xpose.msra.mxu0 0.0
        %1189 = vmatprep.subr.mxu0 0.0
        %1190 = vmatpush1.xpose.msra.mxu0 0.0
        %1191 = vmatprep.subr.mxu0 0.0
        %1192 = vmatpush1.xpose.msra.mxu0 0.0
        %1193 = vmatprep.subr.mxu0 0.0
        %1194 = vmatpush1.xpose.msra.mxu0 0.0
        %1195 = vmatprep.subr.mxu0 0.0
        %1196 = vmatpush1.xpose.msra.mxu0 0.0
        %1197 = vmatprep.subr.mxu0 0.0
        %1198 = vmatpush1.xpose.msra.mxu0 0.0
        %1199 = vmatprep.subr.mxu0 0.0
        %1200 = vmatpush1.xpose.msra.mxu0 0.0
        %1201 = vmatprep.subr.mxu0 0.0
        %1202 = vmatpush1.xpose.msra.mxu0 0.0
        %1203 = vmatprep.subr.mxu0 0.0
        %1204 = vmatpush1.xpose.msra.mxu0 0.0
        %1205 = vmatprep.subr.mxu0 0.0
        %1206 = vmatpush1.xpose.msra.mxu0 0.0
        %1207 = vmatprep.subr.mxu0 0.0
        %1208 = vmatpush1.xpose.msra.mxu0 0.0
        %1209 = vmatprep.subr.mxu0 0.0
        %1210 = vmatpush1.xpose.msra.mxu0 0.0
        %1211 = vmatprep.mubr.f32.mxu0 0.0
        %1212 = vmatmul.mubr.f32.gmra.mrb[0].mxu0 %v1136
        %v1213 = vpop.f32.mrb[0].mxu0
        %v1214 = vadd.f32 0.0, %v1213
        %v1215 = vpop.f32.mrb[0].mxu0
        %1216 = vmatprep.mubr.f32.mxu0 0.0
        %1217 = vmatmul.mubr.f32.gmra.mrb[0].mxu0 %v1139
        %v1218 = vpop.f32.mrb[0].mxu0
        %v1219 = vadd.f32 0.0, %v1218
        %v1220 = vpop.f32.mrb[0].mxu0
        %1221 = vdwg.mxu0
        %v1222 = vsel %vm895, %v1214, -1e+30
        %v1223 = vsel %vm896, %v1219, -1e+30
        %vm1224 = vcmask 130048
        %v1225 = vsel %vm1224, %v1222, -inf
        %1226 = vmax.xlane.f32.xlu0 %v1225
        %v1227 = vpop.xlane.xlu0 %1226
        %v1228 = vsel %vm1224, %v1223, -inf
        %1229 = vmax.xlane.f32.xlu0 %v1228
        %v1230 = vpop.xlane.xlu0 %1229
        %v1231 = vmax.f32 %v905, %v1227
        %v1232 = vmax.f32 %v906, %v1230
        %v1233 = vsub.f32 %v905, %v1231
        %v1234 = vsub.f32 %v906, %v1232
        %v1235 = vmul.f32 %v1233, 1.442695
        %v1236 = vpow.pop %v1235
        %v1237 = vmul.f32 %v1234, 1.442695
        %v1238 = vpow.pop %v1237
        %v1239 = vsub.f32 %v1222, %v1231
        %v1240 = vsub.f32 %v1223, %v1232
        %v1241 = vmul.f32 %v1239, 1.442695
        %v1242 = vpow.pop %v1241
        %v1243 = vmul.f32 %v1240, 1.442695
        %v1244 = vpow.pop %v1243
        %v1245 = vmul.f32 %v1236, %v907
        %v1246 = vmul.f32 %v1238, %v908
        %v1247 = vsel %vm1224, %v1242, 0.0
        %1248 = vadd.xlane.f32.xlu0 %v1247
        %v1249 = vpop.xlane.xlu0 %1248
        %v1250 = vsel %vm1224, %v1244, 0.0
        %1251 = vadd.xlane.f32.xlu0 %v1250
        %v1252 = vpop.xlane.xlu0 %1251
        %v1253 = vadd.f32 %v1245, %v1249
        %v1254 = vadd.f32 %v1246, %v1252
        %v1255 = vmul.f32 %v1236, %v909
        %v1256 = vmul.f32 %v1238, %v910
        %v1258 = vsel %vm1224, %v1242, 0
        %v1261 = vsel %vm1224, %v1244, 0
        %1263 = vmatprep.subr.mxu0 0.0
        %1264 = vmatpush1.msra.mxu0 %v1132
        %1265 = vmatprep.subr.mxu0 0.0
        %1266 = vmatpush1.msra.mxu0 %v1133
        %1267 = vmatprep.subr.mxu0 0.0
        %1268 = vmatpush1.msra.mxu0 0.0
        %1269 = vmatprep.subr.mxu0 0.0
        %1270 = vmatpush1.msra.mxu0 0.0
        %1271 = vmatprep.subr.mxu0 0.0
        %1272 = vmatpush1.msra.mxu0 0.0
        %1273 = vmatprep.subr.mxu0 0.0
        %1274 = vmatpush1.msra.mxu0 0.0
        %1275 = vmatprep.subr.mxu0 0.0
        %1276 = vmatpush1.msra.mxu0 0.0
        %1277 = vmatprep.subr.mxu0 0.0
        %1278 = vmatpush1.msra.mxu0 0.0
        %1279 = vmatprep.subr.mxu0 0.0
        %1280 = vmatpush1.msra.mxu0 0.0
        %1281 = vmatprep.subr.mxu0 0.0
        %1282 = vmatpush1.msra.mxu0 0.0
        %1283 = vmatprep.subr.mxu0 0.0
        %1284 = vmatpush1.msra.mxu0 0.0
        %1285 = vmatprep.subr.mxu0 0.0
        %1286 = vmatpush1.msra.mxu0 0.0
        %1287 = vmatprep.subr.mxu0 0.0
        %1288 = vmatpush1.msra.mxu0 0.0
        %1289 = vmatprep.subr.mxu0 0.0
        %1290 = vmatpush1.msra.mxu0 0.0
        %1291 = vmatprep.subr.mxu0 0.0
        %1292 = vmatpush1.msra.mxu0 0.0
        %1293 = vmatprep.subr.mxu0 0.0
        %1294 = vmatpush1.msra.mxu0 0.0
        %1295 = vmatprep.subr.mxu0 0.0
        %1296 = vmatpush1.msra.mxu0 0.0
        %1297 = vmatprep.subr.mxu0 0.0
        %1298 = vmatpush1.msra.mxu0 0.0
        %1299 = vmatprep.subr.mxu0 0.0
        %1300 = vmatpush1.msra.mxu0 0.0
        %1301 = vmatprep.subr.mxu0 0.0
        %1302 = vmatpush1.msra.mxu0 0.0
        %1303 = vmatprep.subr.mxu0 0.0
        %1304 = vmatpush1.msra.mxu0 0.0
        %1305 = vmatprep.subr.mxu0 0.0
        %1306 = vmatpush1.msra.mxu0 0.0
        %1307 = vmatprep.subr.mxu0 0.0
        %1308 = vmatpush1.msra.mxu0 0.0
        %1309 = vmatprep.subr.mxu0 0.0
        %1310 = vmatpush1.msra.mxu0 0.0
        %1311 = vmatprep.subr.mxu0 0.0
        %1312 = vmatpush1.msra.mxu0 0.0
        %1313 = vmatprep.subr.mxu0 0.0
        %1314 = vmatpush1.msra.mxu0 0.0
        %1315 = vmatprep.subr.mxu0 0.0
        %1316 = vmatpush1.msra.mxu0 0.0
        %1317 = vmatprep.subr.mxu0 0.0
        %1318 = vmatpush1.msra.mxu0 0.0
        %1319 = vmatprep.subr.mxu0 0.0
        %1320 = vmatpush1.msra.mxu0 0.0
        %1321 = vmatprep.subr.mxu0 0.0
        %1322 = vmatpush1.msra.mxu0 0.0
        %1323 = vmatprep.subr.mxu0 0.0
        %1324 = vmatpush1.msra.mxu0 0.0
        %1325 = vmatprep.subr.mxu0 0.0
        %1326 = vmatpush1.msra.mxu0 0.0
        %1327 = vmatprep.mubr.f32.mxu0 0.0
        %1328 = vmatmul.mubr.f32.gmra.mrb[0].mxu0 %v1258
        %v1329 = vpop.f32.mrb[0].mxu0
        %v1330 = vadd.f32 0.0, %v1329
        %v1331 = vpop.f32.mrb[0].mxu0
        %1332 = vmatprep.mubr.f32.mxu0 0.0
        %1333 = vmatmul.mubr.f32.gmra.mrb[0].mxu0 %v1261
        %v1334 = vpop.f32.mrb[0].mxu0
        %v1335 = vadd.f32 0.0, %v1334
        %v1336 = vpop.f32.mrb[0].mxu0
        %1337 = vdwg.mxu0
        %v1338 = vadd.f32 %v1255, %v1330
        %v1339 = vadd.f32 %v1256, %v1335
        %v1340 = vrcp.pop %v1253
        %v1341 = vrcp.pop %v1254
        %v1342 = vmul.f32 %v1338, %v1340
        %v1343 = vmul.f32 %v1339, %v1341
        %1344 = vst.msk [vmem:[#allocation4] sm:$0xff] %vm1134, %v1342
        %1345 = vst.msk [vmem:[#allocation4 + $0x8] sm:$0xff] %vm1134, %v1343
        %v1346 = vld [vmem:[#allocation3] sm:$0xff]
        %v1347 = vld [vmem:[#allocation3 + $0x8] sm:$0xff]
        // While loop
        $region116: #{tpu_custom_call.1} parent=79 // loop_pre_header
          _
        $region117: #{tpu_custom_call.1} parent=79 // loop_header
          %s1349 = sphi 0, %s1351
          %p1350 = scmp.ge.s32.totalorder %s1349, %s40
          %v1354 = vphi -1e+30, %v1471
          %v1355 = vphi -1e+30, %v1472
          %v1356 = vphi 0.0, %v1493
          %v1357 = vphi 0.0, %v1494
          %v1358 = vphi 0.0, %v1586
          %v1359 = vphi 0.0, %v1587
        $region118: #{tpu_custom_call.1} parent=79 // loop_header_branch
          %1353 = sbr.rel (%p1350) target = $region122
        $region119: #{tpu_custom_call.1} parent=79 // loop_body
          %s1360 = smul.u32 %s1349, 16
          %s1361 = sshra.s32 %s1360, 3
          %s1362 = sand.u32 %s1360, 7
          %s1363 = smul.u32 %s1361, 2
          %s1364 = smul.addr %s1363, 8
          %s1365 = scalar_lea.vmem [#allocation2], %s1364
          %v1366 = vld [vmem:[%s1365] sm:$0xff]
          %v1367 = vld [vmem:[%s1365 + $0x10] sm:$0xff]
          %v1368 = vld [vmem:[%s1365 + $0x8] sm:$0xff]
          %v1369 = vld [vmem:[%s1365 + $0x18] sm:$0xff]
          %1372 = vrot.lane.b32.xlu0 %v1346, 64
          %v1373 = vpop.permute.xlu0 %1372
          %1374 = vrot.lane.b32.xlu0 %v1347, 64
          %v1375 = vpop.permute.xlu0 %1374
          %1378 = vrot.lane.b32.xlu0 %v1366, 64
          %v1379 = vpop.permute.xlu0 %1378
          %1380 = vrot.lane.b32.xlu0 %v1367, 64
          %v1381 = vpop.permute.xlu0 %1380
          %v1382 = vsel %vm1134, %v1373, 0
          %v1384 = vsel %vm1134, %v1375, 0
          %v1386 = vsel %vm1134, %v1379, 0
          %v1388 = vsel %vm1134, %v1381, 0
          %1390 = vmatprep.subr.mxu0 0.0
          %1391 = vmatpush1.xpose.msra.mxu0 %v1386
          %1392 = vmatprep.subr.mxu0 0.0
          %1393 = vmatpush1.xpose.msra.mxu0 %v1388
          %1394 = vmatprep.subr.mxu0 0.0
          %1395 = vmatpush1.xpose.msra.mxu0 0.0
          %1396 = vmatprep.subr.mxu0 0.0
          %1397 = vmatpush1.xpose.msra.mxu0 0.0
          %1398 = vmatprep.subr.mxu0 0.0
          %1399 = vmatpush1.xpose.msra.mxu0 0.0
          %1400 = vmatprep.subr.mxu0 0.0
          %1401 = vmatpush1.xpose.msra.mxu0 0.0
          %1402 = vmatprep.subr.mxu0 0.0
          %1403 = vmatpush1.xpose.msra.mxu0 0.0
          %1404 = vmatprep.subr.mxu0 0.0
          %1405 = vmatpush1.xpose.msra.mxu0 0.0
          %1406 = vmatprep.subr.mxu0 0.0
          %1407 = vmatpush1.xpose.msra.mxu0 0.0
          %1408 = vmatprep.subr.mxu0 0.0
          %1409 = vmatpush1.xpose.msra.mxu0 0.0
          %1410 = vmatprep.subr.mxu0 0.0
          %1411 = vmatpush1.xpose.msra.mxu0 0.0
          %1412 = vmatprep.subr.mxu0 0.0
          %1413 = vmatpush1.xpose.msra.mxu0 0.0
          %1414 = vmatprep.subr.mxu0 0.0
          %1415 = vmatpush1.xpose.msra.mxu0 0.0
          %1416 = vmatprep.subr.mxu0 0.0
          %1417 = vmatpush1.xpose.msra.mxu0 0.0
          %1418 = vmatprep.subr.mxu0 0.0
          %1419 = vmatpush1.xpose.msra.mxu0 0.0
          %1420 = vmatprep.subr.mxu0 0.0
          %1421 = vmatpush1.xpose.msra.mxu0 0.0
          %1422 = vmatprep.subr.mxu0 0.0
          %1423 = vmatpush1.xpose.msra.mxu0 0.0
          %1424 = vmatprep.subr.mxu0 0.0
          %1425 = vmatpush1.xpose.msra.mxu0 0.0
          %1426 = vmatprep.subr.mxu0 0.0
          %1427 = vmatpush1.xpose.msra.mxu0 0.0
          %1428 = vmatprep.subr.mxu0 0.0
          %1429 = vmatpush1.xpose.msra.mxu0 0.0
          %1430 = vmatprep.subr.mxu0 0.0
          %1431 = vmatpush1.xpose.msra.mxu0 0.0
          %1432 = vmatprep.subr.mxu0 0.0
          %1433 = vmatpush1.xpose.msra.mxu0 0.0
          %1434 = vmatprep.subr.mxu0 0.0
          %1435 = vmatpush1.xpose.msra.mxu0 0.0
          %1436 = vmatprep.subr.mxu0 0.0
          %1437 = vmatpush1.xpose.msra.mxu0 0.0
          %1438 = vmatprep.subr.mxu0 0.0
          %1439 = vmatpush1.xpose.msra.mxu0 0.0
          %1440 = vmatprep.subr.mxu0 0.0
          %1441 = vmatpush1.xpose.msra.mxu0 0.0
          %1442 = vmatprep.subr.mxu0 0.0
          %1443 = vmatpush1.xpose.msra.mxu0 0.0
          %1444 = vmatprep.subr.mxu0 0.0
          %1445 = vmatpush1.xpose.msra.mxu0 0.0
          %1446 = vmatprep.subr.mxu0 0.0
          %1447 = vmatpush1.xpose.msra.mxu0 0.0
          %1448 = vmatprep.subr.mxu0 0.0
          %1449 = vmatpush1.xpose.msra.mxu0 0.0
          %1450 = vmatprep.subr.mxu0 0.0
          %1451 = vmatpush1.xpose.msra.mxu0 0.0
          %1452 = vmatprep.subr.mxu0 0.0
          %1453 = vmatpush1.xpose.msra.mxu0 0.0
          %1454 = vmatprep.mubr.f32.mxu0 0.0
          %1455 = vmatmul.mubr.f32.gmra.mrb[0].mxu0 %v1382
          %v1456 = vpop.f32.mrb[0].mxu0
          %v1457 = vadd.f32 0.0, %v1456
          %v1458 = vpop.f32.mrb[0].mxu0
          %1459 = vmatprep.mubr.f32.mxu0 0.0
          %1460 = vmatmul.mubr.f32.gmra.mrb[0].mxu0 %v1384
          %v1461 = vpop.f32.mrb[0].mxu0
          %v1462 = vadd.f32 0.0, %v1461
          %v1463 = vpop.f32.mrb[0].mxu0
          %1464 = vdwg.mxu0
          %v1465 = vsel %vm1224, %v1457, -inf
          %1466 = vmax.xlane.f32.xlu0 %v1465
          %v1467 = vpop.xlane.xlu0 %1466
          %v1468 = vsel %vm1224, %v1462, -inf
          %1469 = vmax.xlane.f32.xlu0 %v1468
          %v1470 = vpop.xlane.xlu0 %1469
          %v1471 = vmax.f32 %v1354, %v1467
          %v1472 = vmax.f32 %v1355, %v1470
          %v1473 = vsub.f32 %v1354, %v1471
          %v1474 = vsub.f32 %v1355, %v1472
          %v1475 = vmul.f32 %v1473, 1.442695
          %v1476 = vpow.pop %v1475
          %v1477 = vmul.f32 %v1474, 1.442695
          %v1478 = vpow.pop %v1477
          %v1479 = vsub.f32 %v1457, %v1471
          %v1480 = vsub.f32 %v1462, %v1472
          %v1481 = vmul.f32 %v1479, 1.442695
          %v1482 = vpow.pop %v1481
          %v1483 = vmul.f32 %v1480, 1.442695
          %v1484 = vpow.pop %v1483
          %v1485 = vmul.f32 %v1476, %v1356
          %v1486 = vmul.f32 %v1478, %v1357
          %v1487 = vsel %vm1224, %v1482, 0.0
          %1488 = vadd.xlane.f32.xlu0 %v1487
          %v1489 = vpop.xlane.xlu0 %1488
          %v1490 = vsel %vm1224, %v1484, 0.0
          %1491 = vadd.xlane.f32.xlu0 %v1490
          %v1492 = vpop.xlane.xlu0 %1491
          %v1493 = vadd.f32 %v1485, %v1489
          %v1494 = vadd.f32 %v1486, %v1492
          %v1495 = vmul.f32 %v1476, %v1358
          %v1496 = vmul.f32 %v1478, %v1359
          %1499 = vrot.lane.b32.xlu0 %v1368, 64
          %v1500 = vpop.permute.xlu0 %1499
          %1501 = vrot.lane.b32.xlu0 %v1369, 64
          %v1502 = vpop.permute.xlu0 %1501
          %v1506 = vsel %vm1224, %v1482, 0
          %v1509 = vsel %vm1224, %v1484, 0
          %1511 = vmatprep.subr.mxu0 0.0
          %1512 = vmatpush1.msra.mxu0 %v1500
          %1513 = vmatprep.subr.mxu0 0.0
          %1514 = vmatpush1.msra.mxu0 %v1502
          %1515 = vmatprep.subr.mxu0 0.0
          %1516 = vmatpush1.msra.mxu0 0.0
          %1517 = vmatprep.subr.mxu0 0.0
          %1518 = vmatpush1.msra.mxu0 0.0
          %1519 = vmatprep.subr.mxu0 0.0
          %1520 = vmatpush1.msra.mxu0 0.0
          %1521 = vmatprep.subr.mxu0 0.0
          %1522 = vmatpush1.msra.mxu0 0.0
          %1523 = vmatprep.subr.mxu0 0.0
          %1524 = vmatpush1.msra.mxu0 0.0
          %1525 = vmatprep.subr.mxu0 0.0
          %1526 = vmatpush1.msra.mxu0 0.0
          %1527 = vmatprep.subr.mxu0 0.0
          %1528 = vmatpush1.msra.mxu0 0.0
          %1529 = vmatprep.subr.mxu0 0.0
          %1530 = vmatpush1.msra.mxu0 0.0
          %1531 = vmatprep.subr.mxu0 0.0
          %1532 = vmatpush1.msra.mxu0 0.0
          %1533 = vmatprep.subr.mxu0 0.0
          %1534 = vmatpush1.msra.mxu0 0.0
          %1535 = vmatprep.subr.mxu0 0.0
          %1536 = vmatpush1.msra.mxu0 0.0
          %1537 = vmatprep.subr.mxu0 0.0
          %1538 = vmatpush1.msra.mxu0 0.0
          %1539 = vmatprep.subr.mxu0 0.0
          %1540 = vmatpush1.msra.mxu0 0.0
          %1541 = vmatprep.subr.mxu0 0.0
          %1542 = vmatpush1.msra.mxu0 0.0
          %1543 = vmatprep.subr.mxu0 0.0
          %1544 = vmatpush1.msra.mxu0 0.0
          %1545 = vmatprep.subr.mxu0 0.0
          %1546 = vmatpush1.msra.mxu0 0.0
          %1547 = vmatprep.subr.mxu0 0.0
          %1548 = vmatpush1.msra.mxu0 0.0
          %1549 = vmatprep.subr.mxu0 0.0
          %1550 = vmatpush1.msra.mxu0 0.0
          %1551 = vmatprep.subr.mxu0 0.0
          %1552 = vmatpush1.msra.mxu0 0.0
          %1553 = vmatprep.subr.mxu0 0.0
          %1554 = vmatpush1.msra.mxu0 0.0
          %1555 = vmatprep.subr.mxu0 0.0
          %1556 = vmatpush1.msra.mxu0 0.0
          %1557 = vmatprep.subr.mxu0 0.0
          %1558 = vmatpush1.msra.mxu0 0.0
          %1559 = vmatprep.subr.mxu0 0.0
          %1560 = vmatpush1.msra.mxu0 0.0
          %1561 = vmatprep.subr.mxu0 0.0
          %1562 = vmatpush1.msra.mxu0 0.0
          %1563 = vmatprep.subr.mxu0 0.0
          %1564 = vmatpush1.msra.mxu0 0.0
          %1565 = vmatprep.subr.mxu0 0.0
          %1566 = vmatpush1.msra.mxu0 0.0
          %1567 = vmatprep.subr.mxu0 0.0
          %1568 = vmatpush1.msra.mxu0 0.0
          %1569 = vmatprep.subr.mxu0 0.0
          %1570 = vmatpush1.msra.mxu0 0.0
          %1571 = vmatprep.subr.mxu0 0.0
          %1572 = vmatpush1.msra.mxu0 0.0
          %1573 = vmatprep.subr.mxu0 0.0
          %1574 = vmatpush1.msra.mxu0 0.0
          %1575 = vmatprep.mubr.f32.mxu0 0.0
          %1576 = vmatmul.mubr.f32.gmra.mrb[0].mxu0 %v1506
          %v1577 = vpop.f32.mrb[0].mxu0
          %v1578 = vadd.f32 0.0, %v1577
          %v1579 = vpop.f32.mrb[0].mxu0
          %1580 = vmatprep.mubr.f32.mxu0 0.0
          %1581 = vmatmul.mubr.f32.gmra.mrb[0].mxu0 %v1509
          %v1582 = vpop.f32.mrb[0].mxu0
          %v1583 = vadd.f32 0.0, %v1582
          %v1584 = vpop.f32.mrb[0].mxu0
          %1585 = vdwg.mxu0
          %v1586 = vadd.f32 %v1495, %v1578
          %v1587 = vadd.f32 %v1496, %v1583
        $region120: #{tpu_custom_call.1} parent=79 // loop_footer
          %s1351 = sadd.s32 %s1349, 1
        $region121: #{tpu_custom_call.1} parent=79 // loop_footer_branch
          %1348 = sbr.rel target = $region117
        $region122: #{tpu_custom_call.1} parent=79 // loop_exit
          _
        %v1588 = vld [vmem:[%s1129] sm:$0xff]
        %v1589 = vld [vmem:[%s1129 + $0x10] sm:$0xff]
        %v1590 = vld [vmem:[%s1129 + $0x8] sm:$0xff]
        %v1591 = vld [vmem:[%s1129 + $0x18] sm:$0xff]
        %1594 = vrot.lane.b32.xlu0 %v1346, 64
        %v1595 = vpop.permute.xlu0 %1594
        %1596 = vrot.lane.b32.xlu0 %v1347, 64
        %v1597 = vpop.permute.xlu0 %1596
        %1600 = vrot.lane.b32.xlu0 %v1588, 64
        %v1601 = vpop.permute.xlu0 %1600
        %1602 = vrot.lane.b32.xlu0 %v1589, 64
        %v1603 = vpop.permute.xlu0 %1602
        %v1604 = vsel %vm1134, %v1595, 0
        %v1606 = vsel %vm1134, %v1597, 0
        %v1608 = vsel %vm1134, %v1601, 0
        %v1610 = vsel %vm1134, %v1603, 0
        %1612 = vmatprep.subr.mxu0 0.0
        %1613 = vmatpush1.xpose.msra.mxu0 %v1608
        %1614 = vmatprep.subr.mxu0 0.0
        %1615 = vmatpush1.xpose.msra.mxu0 %v1610
        %1616 = vmatprep.subr.mxu0 0.0
        %1617 = vmatpush1.xpose.msra.mxu0 0.0
        %1618 = vmatprep.subr.mxu0 0.0
        %1619 = vmatpush1.xpose.msra.mxu0 0.0
        %1620 = vmatprep.subr.mxu0 0.0
        %1621 = vmatpush1.xpose.msra.mxu0 0.0
        %1622 = vmatprep.subr.mxu0 0.0
        %1623 = vmatpush1.xpose.msra.mxu0 0.0
        %1624 = vmatprep.subr.mxu0 0.0
        %1625 = vmatpush1.xpose.msra.mxu0 0.0
        %1626 = vmatprep.subr.mxu0 0.0
        %1627 = vmatpush1.xpose.msra.mxu0 0.0
        %1628 = vmatprep.subr.mxu0 0.0
        %1629 = vmatpush1.xpose.msra.mxu0 0.0
        %1630 = vmatprep.subr.mxu0 0.0
        %1631 = vmatpush1.xpose.msra.mxu0 0.0
        %1632 = vmatprep.subr.mxu0 0.0
        %1633 = vmatpush1.xpose.msra.mxu0 0.0
        %1634 = vmatprep.subr.mxu0 0.0
        %1635 = vmatpush1.xpose.msra.mxu0 0.0
        %1636 = vmatprep.subr.mxu0 0.0
        %1637 = vmatpush1.xpose.msra.mxu0 0.0
        %1638 = vmatprep.subr.mxu0 0.0
        %1639 = vmatpush1.xpose.msra.mxu0 0.0
        %1640 = vmatprep.subr.mxu0 0.0
        %1641 = vmatpush1.xpose.msra.mxu0 0.0
        %1642 = vmatprep.subr.mxu0 0.0
        %1643 = vmatpush1.xpose.msra.mxu0 0.0
        %1644 = vmatprep.subr.mxu0 0.0
        %1645 = vmatpush1.xpose.msra.mxu0 0.0
        %1646 = vmatprep.subr.mxu0 0.0
        %1647 = vmatpush1.xpose.msra.mxu0 0.0
        %1648 = vmatprep.subr.mxu0 0.0
        %1649 = vmatpush1.xpose.msra.mxu0 0.0
        %1650 = vmatprep.subr.mxu0 0.0
        %1651 = vmatpush1.xpose.msra.mxu0 0.0
        %1652 = vmatprep.subr.mxu0 0.0
        %1653 = vmatpush1.xpose.msra.mxu0 0.0
        %1654 = vmatprep.subr.mxu0 0.0
        %1655 = vmatpush1.xpose.msra.mxu0 0.0
        %1656 = vmatprep.subr.mxu0 0.0
        %1657 = vmatpush1.xpose.msra.mxu0 0.0
        %1658 = vmatprep.subr.mxu0 0.0
        %1659 = vmatpush1.xpose.msra.mxu0 0.0
        %1660 = vmatprep.subr.mxu0 0.0
        %1661 = vmatpush1.xpose.msra.mxu0 0.0
        %1662 = vmatprep.subr.mxu0 0.0
        %1663 = vmatpush1.xpose.msra.mxu0 0.0
        %1664 = vmatprep.subr.mxu0 0.0
        %1665 = vmatpush1.xpose.msra.mxu0 0.0
        %1666 = vmatprep.subr.mxu0 0.0
        %1667 = vmatpush1.xpose.msra.mxu0 0.0
        %1668 = vmatprep.subr.mxu0 0.0
        %1669 = vmatpush1.xpose.msra.mxu0 0.0
        %1670 = vmatprep.subr.mxu0 0.0
        %1671 = vmatpush1.xpose.msra.mxu0 0.0
        %1672 = vmatprep.subr.mxu0 0.0
        %1673 = vmatpush1.xpose.msra.mxu0 0.0
        %1674 = vmatprep.subr.mxu0 0.0
        %1675 = vmatpush1.xpose.msra.mxu0 0.0
        %1676 = vmatprep.mubr.f32.mxu0 0.0
        %1677 = vmatmul.mubr.f32.gmra.mrb[0].mxu0 %v1604
        %v1678 = vpop.f32.mrb[0].mxu0
        %v1679 = vadd.f32 0.0, %v1678
        %v1680 = vpop.f32.mrb[0].mxu0
        %1681 = vmatprep.mubr.f32.mxu0 0.0
        %1682 = vmatmul.mubr.f32.gmra.mrb[0].mxu0 %v1606
        %v1683 = vpop.f32.mrb[0].mxu0
        %v1684 = vadd.f32 0.0, %v1683
        %v1685 = vpop.f32.mrb[0].mxu0
        %1686 = vdwg.mxu0
        %v1687 = vsel %vm895, %v1679, -1e+30
        %v1688 = vsel %vm896, %v1684, -1e+30
        %v1689 = vsel %vm1224, %v1687, -inf
        %1690 = vmax.xlane.f32.xlu0 %v1689
        %v1691 = vpop.xlane.xlu0 %1690
        %v1692 = vsel %vm1224, %v1688, -inf
        %1693 = vmax.xlane.f32.xlu0 %v1692
        %v1694 = vpop.xlane.xlu0 %1693
        %v1695 = vmax.f32 %v1354, %v1691
        %v1696 = vmax.f32 %v1355, %v1694
        %v1697 = vsub.f32 %v1354, %v1695
        %v1698 = vsub.f32 %v1355, %v1696
        %v1699 = vmul.f32 %v1697, 1.442695
        %v1700 = vpow.pop %v1699
        %v1701 = vmul.f32 %v1698, 1.442695
        %v1702 = vpow.pop %v1701
        %v1703 = vsub.f32 %v1687, %v1695
        %v1704 = vsub.f32 %v1688, %v1696
        %v1705 = vmul.f32 %v1703, 1.442695
        %v1706 = vpow.pop %v1705
        %v1707 = vmul.f32 %v1704, 1.442695
        %v1708 = vpow.pop %v1707
        %v1709 = vmul.f32 %v1700, %v1356
        %v1710 = vmul.f32 %v1702, %v1357
        %v1711 = vsel %vm1224, %v1706, 0.0
        %1712 = vadd.xlane.f32.xlu0 %v1711
        %v1713 = vpop.xlane.xlu0 %1712
        %v1714 = vsel %vm1224, %v1708, 0.0
        %1715 = vadd.xlane.f32.xlu0 %v1714
        %v1716 = vpop.xlane.xlu0 %1715
        %v1717 = vadd.f32 %v1709, %v1713
        %v1718 = vadd.f32 %v1710, %v1716
        %v1719 = vmul.f32 %v1700, %v1358
        %v1720 = vmul.f32 %v1702, %v1359
        %1723 = vrot.lane.b32.xlu0 %v1590, 64
        %v1724 = vpop.permute.xlu0 %1723
        %1725 = vrot.lane.b32.xlu0 %v1591, 64
        %v1726 = vpop.permute.xlu0 %1725
        %v1730 = vsel %vm1224, %v1706, 0
        %v1733 = vsel %vm1224, %v1708, 0
        %1735 = vmatprep.subr.mxu0 0.0
        %1736 = vmatpush1.msra.mxu0 %v1724
        %1737 = vmatprep.subr.mxu0 0.0
        %1738 = vmatpush1.msra.mxu0 %v1726
        %1739 = vmatprep.subr.mxu0 0.0
        %1740 = vmatpush1.msra.mxu0 0.0
        %1741 = vmatprep.subr.mxu0 0.0
        %1742 = vmatpush1.msra.mxu0 0.0
        %1743 = vmatprep.subr.mxu0 0.0
        %1744 = vmatpush1.msra.mxu0 0.0
        %1745 = vmatprep.subr.mxu0 0.0
        %1746 = vmatpush1.msra.mxu0 0.0
        %1747 = vmatprep.subr.mxu0 0.0
        %1748 = vmatpush1.msra.mxu0 0.0
        %1749 = vmatprep.subr.mxu0 0.0
        %1750 = vmatpush1.msra.mxu0 0.0
        %1751 = vmatprep.subr.mxu0 0.0
        %1752 = vmatpush1.msra.mxu0 0.0
        %1753 = vmatprep.subr.mxu0 0.0
        %1754 = vmatpush1.msra.mxu0 0.0
        %1755 = vmatprep.subr.mxu0 0.0
        %1756 = vmatpush1.msra.mxu0 0.0
        %1757 = vmatprep.subr.mxu0 0.0
        %1758 = vmatpush1.msra.mxu0 0.0
        %1759 = vmatprep.subr.mxu0 0.0
        %1760 = vmatpush1.msra.mxu0 0.0
        %1761 = vmatprep.subr.mxu0 0.0
        %1762 = vmatpush1.msra.mxu0 0.0
        %1763 = vmatprep.subr.mxu0 0.0
        %1764 = vmatpush1.msra.mxu0 0.0
        %1765 = vmatprep.subr.mxu0 0.0
        %1766 = vmatpush1.msra.mxu0 0.0
        %1767 = vmatprep.subr.mxu0 0.0
        %1768 = vmatpush1.msra.mxu0 0.0
        %1769 = vmatprep.subr.mxu0 0.0
        %1770 = vmatpush1.msra.mxu0 0.0
        %1771 = vmatprep.subr.mxu0 0.0
        %1772 = vmatpush1.msra.mxu0 0.0
        %1773 = vmatprep.subr.mxu0 0.0
        %1774 = vmatpush1.msra.mxu0 0.0
        %1775 = vmatprep.subr.mxu0 0.0
        %1776 = vmatpush1.msra.mxu0 0.0
        %1777 = vmatprep.subr.mxu0 0.0
        %1778 = vmatpush1.msra.mxu0 0.0
        %1779 = vmatprep.subr.mxu0 0.0
        %1780 = vmatpush1.msra.mxu0 0.0
        %1781 = vmatprep.subr.mxu0 0.0
        %1782 = vmatpush1.msra.mxu0 0.0
        %1783 = vmatprep.subr.mxu0 0.0
        %1784 = vmatpush1.msra.mxu0 0.0
        %1785 = vmatprep.subr.mxu0 0.0
        %1786 = vmatpush1.msra.mxu0 0.0
        %1787 = vmatprep.subr.mxu0 0.0
        %1788 = vmatpush1.msra.mxu0 0.0
        %1789 = vmatprep.subr.mxu0 0.0
        %1790 = vmatpush1.msra.mxu0 0.0
        %1791 = vmatprep.subr.mxu0 0.0
        %1792 = vmatpush1.msra.mxu0 0.0
        %1793 = vmatprep.subr.mxu0 0.0
        %1794 = vmatpush1.msra.mxu0 0.0
        %1795 = vmatprep.subr.mxu0 0.0
        %1796 = vmatpush1.msra.mxu0 0.0
        %1797 = vmatprep.subr.mxu0 0.0
        %1798 = vmatpush1.msra.mxu0 0.0
        %1799 = vmatprep.mubr.f32.mxu0 0.0
        %1800 = vmatmul.mubr.f32.gmra.mrb[0].mxu0 %v1730
        %v1801 = vpop.f32.mrb[0].mxu0
        %v1802 = vadd.f32 0.0, %v1801
        %v1803 = vpop.f32.mrb[0].mxu0
        %1804 = vmatprep.mubr.f32.mxu0 0.0
        %1805 = vmatmul.mubr.f32.gmra.mrb[0].mxu0 %v1733
        %v1806 = vpop.f32.mrb[0].mxu0
        %v1807 = vadd.f32 0.0, %v1806
        %v1808 = vpop.f32.mrb[0].mxu0
        %1809 = vdwg.mxu0
        %v1810 = vadd.f32 %v1719, %v1802
        %v1811 = vadd.f32 %v1720, %v1807
        %v1812 = vrcp.pop %v1717
        %v1813 = vrcp.pop %v1718
        %v1814 = vmul.f32 %v1810, %v1812
        %v1815 = vmul.f32 %v1811, %v1813
        %1818 = vrot.lane.b32.xlu0 %v1814, 64
        %v1819 = vpop.permute.xlu0 %1818
        %1820 = vrot.lane.b32.xlu0 %v1815, 64
        %v1821 = vpop.permute.xlu0 %1820
        %vm1824 = vcmask 1048064
        %1825 = vst.msk [vmem:[#allocation4] sm:$0xff] %vm1824, %v1819
        %1826 = vst.msk [vmem:[#allocation4 + $0x8] sm:$0xff] %vm1824, %v1821
        %v1827 = vld [vmem:[#allocation4] sm:$0xff]
        %v1828 = vld [vmem:[#allocation4 + $0x8] sm:$0xff]
        %v1829 = vld [vmem:[#allocation11] sm:$0xff]
        %v1830 = vld [vmem:[#allocation11 + $0x8] sm:$0xff]
        %v1831 = vld [vmem:[#allocation11 + $0x10] sm:$0xff]
        %v1832 = vld [vmem:[#allocation11 + $0x18] sm:$0xff]
        %v1833 = vld [vmem:[#allocation11 + $0x20] sm:$0xff]
        %v1834 = vld [vmem:[#allocation11 + $0x28] sm:$0xff]
        %v1835 = vld [vmem:[#allocation11 + $0x30] sm:$0xff]
        %v1836 = vld [vmem:[#allocation11 + $0x38] sm:$0xff]
        %v1837 = vld [vmem:[#allocation11 + $0x40] sm:$0xff]
        %v1838 = vld [vmem:[#allocation11 + $0x48] sm:$0xff]
        %v1839 = vld [vmem:[#allocation11 + $0x50] sm:$0xff]
        %v1840 = vld [vmem:[#allocation11 + $0x58] sm:$0xff]
        %v1841 = vld [vmem:[#allocation11 + $0x60] sm:$0xff]
        %v1842 = vld [vmem:[#allocation11 + $0x68] sm:$0xff]
        %v1843 = vld [vmem:[#allocation11 + $0x70] sm:$0xff]
        %v1844 = vld [vmem:[#allocation11 + $0x78] sm:$0xff]
        %v1845 = vld [vmem:[%s6] sm:$0x1]
        %v1847 = vlaneseq
        %v1848 = vshrl.u32 %v1847, 7
        %v1849 = vsub.s32 0, %v1848
        %v1850 = vrot.slane %v1845, %v1849
        %1852 = vmatprep.subr.mxu0 0.0
        %1853 = vmatpush1.msra.mxu0 %v1829
        %1854 = vmatprep.subr.mxu0 0.0
        %1855 = vmatpush1.msra.mxu0 %v1830
        %1856 = vmatprep.subr.mxu0 0.0
        %1857 = vmatpush1.msra.mxu0 %v1831
        %1858 = vmatprep.subr.mxu0 0.0
        %1859 = vmatpush1.msra.mxu0 %v1832
        %1860 = vmatprep.subr.mxu0 0.0
        %1861 = vmatpush1.msra.mxu0 %v1833
        %1862 = vmatprep.subr.mxu0 0.0
        %1863 = vmatpush1.msra.mxu0 %v1834
        %1864 = vmatprep.subr.mxu0 0.0
        %1865 = vmatpush1.msra.mxu0 %v1835
        %1866 = vmatprep.subr.mxu0 0.0
        %1867 = vmatpush1.msra.mxu0 %v1836
        %1868 = vmatprep.subr.mxu0 0.0
        %1869 = vmatpush1.msra.mxu0 %v1837
        %1870 = vmatprep.subr.mxu0 0.0
        %1871 = vmatpush1.msra.mxu0 %v1838
        %1872 = vmatprep.subr.mxu0 0.0
        %1873 = vmatpush1.msra.mxu0 %v1839
        %1874 = vmatprep.subr.mxu0 0.0
        %1875 = vmatpush1.msra.mxu0 %v1840
        %1876 = vmatprep.subr.mxu0 0.0
        %1877 = vmatpush1.msra.mxu0 %v1841
        %1878 = vmatprep.subr.mxu0 0.0
        %1879 = vmatpush1.msra.mxu0 %v1842
        %1880 = vmatprep.subr.mxu0 0.0
        %1881 = vmatpush1.msra.mxu0 %v1843
        %1882 = vmatprep.subr.mxu0 0.0
        %1883 = vmatpush1.msra.mxu0 %v1844
        %1884 = vmatprep.subr.mxu0 0.0
        %1885 = vmatpush1.msra.mxu0 0.0
        %1886 = vmatprep.subr.mxu0 0.0
        %1887 = vmatpush1.msra.mxu0 0.0
        %1888 = vmatprep.subr.mxu0 0.0
        %1889 = vmatpush1.msra.mxu0 0.0
        %1890 = vmatprep.subr.mxu0 0.0
        %1891 = vmatpush1.msra.mxu0 0.0
        %1892 = vmatprep.subr.mxu0 0.0
        %1893 = vmatpush1.msra.mxu0 0.0
        %1894 = vmatprep.subr.mxu0 0.0
        %1895 = vmatpush1.msra.mxu0 0.0
        %1896 = vmatprep.subr.mxu0 0.0
        %1897 = vmatpush1.msra.mxu0 0.0
        %1898 = vmatprep.subr.mxu0 0.0
        %1899 = vmatpush1.msra.mxu0 0.0
        %1900 = vmatprep.subr.mxu0 0.0
        %1901 = vmatpush1.msra.mxu0 0.0
        %1902 = vmatprep.subr.mxu0 0.0
        %1903 = vmatpush1.msra.mxu0 0.0
        %1904 = vmatprep.subr.mxu0 0.0
        %1905 = vmatpush1.msra.mxu0 0.0
        %1906 = vmatprep.subr.mxu0 0.0
        %1907 = vmatpush1.msra.mxu0 0.0
        %1908 = vmatprep.subr.mxu0 0.0
        %1909 = vmatpush1.msra.mxu0 0.0
        %1910 = vmatprep.subr.mxu0 0.0
        %1911 = vmatpush1.msra.mxu0 0.0
        %1912 = vmatprep.subr.mxu0 0.0
        %1913 = vmatpush1.msra.mxu0 0.0
        %1914 = vmatprep.subr.mxu0 0.0
        %1915 = vmatpush1.msra.mxu0 0.0
        %1916 = vmatprep.mubr.f32.mxu0 0.0
        %1917 = vmatmul.mubr.f32.gmra.mrb[0].mxu0 %v1827
        %v1918 = vpop.f32.mrb[0].mxu0
        %v1919 = vadd.f32 %v1850, %v1918
        %v1920 = vpop.f32.mrb[0].mxu0
        %1921 = vmatprep.mubr.f32.mxu0 0.0
        %1922 = vmatmul.mubr.f32.gmra.mrb[0].mxu0 %v1828
        %v1923 = vpop.f32.mrb[0].mxu0
        %v1924 = vadd.f32 %v1850, %v1923
        %v1925 = vpop.f32.mrb[0].mxu0
        %1926 = vdwg.mxu0
        %v1927 = vld [vmem:[%s7] sm:$0x1]
        %v1928 = vld [vmem:[%s8] sm:$0x1]
        %v1929 = vld [vmem:[%s13] sm:$0x1]
        %v1930 = vld [vmem:[%s14] sm:$0x1]
        %v1931 = vadd.f32 %v788, %v1919
        %v1932 = vadd.f32 %v789, %v1924
        %1933 = vadd.xlane.f32.xlu0 %v1931
        %v1934 = vpop.xlane.xlu0 %1933
        %1935 = vadd.xlane.f32.xlu0 %v1932
        %v1936 = vpop.xlane.xlu0 %1935
        %v1937 = vrcp.pop 128.0
        %v1938 = vmul.f32 %v1934, %v1937
        %v1939 = vmul.f32 %v1936, %v1937
        %v1940 = vsub.f32 %v1931, %v1938
        %v1941 = vsub.f32 %v1932, %v1939
        %v1942 = vmul.f32 %v1940, %v1940
        %v1943 = vmul.f32 %v1941, %v1941
        %1944 = vadd.xlane.f32.xlu0 %v1942
        %v1945 = vpop.xlane.xlu0 %1944
        %1946 = vadd.xlane.f32.xlu0 %v1943
        %v1947 = vpop.xlane.xlu0 %1946
        %v1948 = vmul.f32 %v1945, %v1937
        %v1949 = vmul.f32 %v1947, %v1937
        %v1950 = vadd.f32 %v1948, 1e-05
        %v1951 = vadd.f32 %v1949, 1e-05
        %v1952 = vrsqrt.pop %v1950
        %v1953 = vrsqrt.pop %v1951
        %v1954 = vmul.f32 %v1940, %v1952
        %v1955 = vmul.f32 %v1941, %v1953
        %v1957 = vlaneseq
        %v1958 = vshrl.u32 %v1957, 7
        %v1959 = vsub.s32 0, %v1958
        %v1960 = vrot.slane %v1927, %v1959
        %v1962 = vmul.f32 %v1954, %v1960
        %v1963 = vmul.f32 %v1955, %v1960
        %v1965 = vlaneseq
        %v1966 = vshrl.u32 %v1965, 7
        %v1967 = vsub.s32 0, %v1966
        %v1968 = vrot.slane %v1928, %v1967
        %v1970 = vadd.f32 %v1962, %v1968
        %v1971 = vadd.f32 %v1963, %v1968
        %v1972 = vld [vmem:[#allocation13] sm:$0xff]
        %v1973 = vld [vmem:[#allocation13 + $0x8] sm:$0xff]
        %v1974 = vld [vmem:[#allocation13 + $0x10] sm:$0xff]
        %v1975 = vld [vmem:[#allocation13 + $0x18] sm:$0xff]
        %v1976 = vld [vmem:[#allocation13 + $0x20] sm:$0xff]
        %v1977 = vld [vmem:[#allocation13 + $0x28] sm:$0xff]
        %v1978 = vld [vmem:[#allocation13 + $0x30] sm:$0xff]
        %v1979 = vld [vmem:[#allocation13 + $0x38] sm:$0xff]
        %v1980 = vld [vmem:[#allocation13 + $0x40] sm:$0xff]
        %v1981 = vld [vmem:[#allocation13 + $0x48] sm:$0xff]
        %v1982 = vld [vmem:[#allocation13 + $0x50] sm:$0xff]
        %v1983 = vld [vmem:[#allocation13 + $0x58] sm:$0xff]
        %v1984 = vld [vmem:[#allocation13 + $0x60] sm:$0xff]
        %v1985 = vld [vmem:[#allocation13 + $0x68] sm:$0xff]
        %v1986 = vld [vmem:[#allocation13 + $0x70] sm:$0xff]
        %v1987 = vld [vmem:[#allocation13 + $0x78] sm:$0xff]
        %v1988 = vld [vmem:[#allocation13 + $0x80] sm:$0xff]
        %v1989 = vld [vmem:[#allocation13 + $0x88] sm:$0xff]
        %v1990 = vld [vmem:[#allocation13 + $0x90] sm:$0xff]
        %v1991 = vld [vmem:[#allocation13 + $0x98] sm:$0xff]
        %v1992 = vld [vmem:[#allocation13 + $0xa0] sm:$0xff]
        %v1993 = vld [vmem:[#allocation13 + $0xa8] sm:$0xff]
        %v1994 = vld [vmem:[#allocation13 + $0xb0] sm:$0xff]
        %v1995 = vld [vmem:[#allocation13 + $0xb8] sm:$0xff]
        %v1996 = vld [vmem:[#allocation13 + $0xc0] sm:$0xff]
        %v1997 = vld [vmem:[#allocation13 + $0xc8] sm:$0xff]
        %v1998 = vld [vmem:[#allocation13 + $0xd0] sm:$0xff]
        %v1999 = vld [vmem:[#allocation13 + $0xd8] sm:$0xff]
        %v2000 = vld [vmem:[#allocation13 + $0xe0] sm:$0xff]
        %v2001 = vld [vmem:[#allocation13 + $0xe8] sm:$0xff]
        %v2002 = vld [vmem:[#allocation13 + $0xf0] sm:$0xff]
        %v2003 = vld [vmem:[#allocation13 + $0xf8] sm:$0xff]
        %v2004 = vld [vmem:[%s10] sm:$0x3]
        %v2006 = vlaneseq
        %v2007 = vshrl.u32 %v2006, 7
        %v2008 = vsub.s32 0, %v2007
        %v2009 = vrot.slane %v2004, %v2008
        %v2010 = vlaneseq
        %v2011 = vshrl.u32 %v2010, 7
        %v2012 = vsub.s32 1, %v2011
        %v2013 = vrot.slane %v2004, %v2012
        %2016 = vmatprep.subr.mxu0 %v1973
        %2017 = vmatpush1.msra.mxu0 %v1972
        %2018 = vmatprep.subr.mxu0 %v1975
        %2019 = vmatpush1.msra.mxu0 %v1974
        %2020 = vmatprep.subr.mxu0 %v1977
        %2021 = vmatpush1.msra.mxu0 %v1976
        %2022 = vmatprep.subr.mxu0 %v1979
        %2023 = vmatpush1.msra.mxu0 %v1978
        %2024 = vmatprep.subr.mxu0 %v1981
        %2025 = vmatpush1.msra.mxu0 %v1980
        %2026 = vmatprep.subr.mxu0 %v1983
        %2027 = vmatpush1.msra.mxu0 %v1982
        %2028 = vmatprep.subr.mxu0 %v1985
        %2029 = vmatpush1.msra.mxu0 %v1984
        %2030 = vmatprep.subr.mxu0 %v1987
        %2031 = vmatpush1.msra.mxu0 %v1986
        %2032 = vmatprep.subr.mxu0 %v1989
        %2033 = vmatpush1.msra.mxu0 %v1988
        %2034 = vmatprep.subr.mxu0 %v1991
        %2035 = vmatpush1.msra.mxu0 %v1990
        %2036 = vmatprep.subr.mxu0 %v1993
        %2037 = vmatpush1.msra.mxu0 %v1992
        %2038 = vmatprep.subr.mxu0 %v1995
        %2039 = vmatpush1.msra.mxu0 %v1994
        %2040 = vmatprep.subr.mxu0 %v1997
        %2041 = vmatpush1.msra.mxu0 %v1996
        %2042 = vmatprep.subr.mxu0 %v1999
        %2043 = vmatpush1.msra.mxu0 %v1998
        %2044 = vmatprep.subr.mxu0 %v2001
        %2045 = vmatpush1.msra.mxu0 %v2000
        %2046 = vmatprep.subr.mxu0 %v2003
        %2047 = vmatpush1.msra.mxu0 %v2002
        %2048 = vmatprep.subr.mxu0 0.0
        %2049 = vmatpush1.msra.mxu0 0.0
        %2050 = vmatprep.subr.mxu0 0.0
        %2051 = vmatpush1.msra.mxu0 0.0
        %2052 = vmatprep.subr.mxu0 0.0
        %2053 = vmatpush1.msra.mxu0 0.0
        %2054 = vmatprep.subr.mxu0 0.0
        %2055 = vmatpush1.msra.mxu0 0.0
        %2056 = vmatprep.subr.mxu0 0.0
        %2057 = vmatpush1.msra.mxu0 0.0
        %2058 = vmatprep.subr.mxu0 0.0
        %2059 = vmatpush1.msra.mxu0 0.0
        %2060 = vmatprep.subr.mxu0 0.0
        %2061 = vmatpush1.msra.mxu0 0.0
        %2062 = vmatprep.subr.mxu0 0.0
        %2063 = vmatpush1.msra.mxu0 0.0
        %2064 = vmatprep.subr.mxu0 0.0
        %2065 = vmatpush1.msra.mxu0 0.0
        %2066 = vmatprep.subr.mxu0 0.0
        %2067 = vmatpush1.msra.mxu0 0.0
        %2068 = vmatprep.subr.mxu0 0.0
        %2069 = vmatpush1.msra.mxu0 0.0
        %2070 = vmatprep.subr.mxu0 0.0
        %2071 = vmatpush1.msra.mxu0 0.0
        %2072 = vmatprep.subr.mxu0 0.0
        %2073 = vmatpush1.msra.mxu0 0.0
        %2074 = vmatprep.subr.mxu0 0.0
        %2075 = vmatpush1.msra.mxu0 0.0
        %2076 = vmatprep.subr.mxu0 0.0
        %2077 = vmatpush1.msra.mxu0 0.0
        %2078 = vmatprep.subr.mxu0 0.0
        %2079 = vmatpush1.msra.mxu0 0.0
        %2080 = vmatprep.mubr.f32.mxu0 0.0
        %2081 = vmatmul.mubr.f32.gmra.mrb[0].mxu0 %v1970
        %v2082 = vpop.f32.mrb[0].mxu0
        %v2083 = vadd.f32 %v2009, %v2082
        %v2084 = vpop.f32.mrb[0].mxu0
        %v2085 = vadd.f32 %v2013, %v2084
        %2086 = vmatprep.mubr.f32.mxu0 0.0
        %2087 = vmatmul.mubr.f32.gmra.mrb[0].mxu0 %v1971
        %v2088 = vpop.f32.mrb[0].mxu0
        %v2089 = vadd.f32 %v2009, %v2088
        %v2090 = vpop.f32.mrb[0].mxu0
        %v2091 = vadd.f32 %v2013, %v2090
        %2092 = vdwg.mxu0
        %vm2093 = vcmp.ge.f32.partialorder %v2083, 0.0
        %vm2094 = vcmp.ge.f32.partialorder %v2085, 0.0
        %vm2095 = vcmp.ge.f32.partialorder %v2089, 0.0
        %vm2096 = vcmp.ge.f32.partialorder %v2091, 0.0
        %v2097 = vmul.f32 %v2083, 0.01
        %v2098 = vmul.f32 %v2085, 0.01
        %v2099 = vmul.f32 %v2089, 0.01
        %v2100 = vmul.f32 %v2091, 0.01
        %v2101 = vsel %vm2093, %v2083, %v2097
        %v2102 = vsel %vm2094, %v2085, %v2098
        %v2103 = vsel %vm2095, %v2089, %v2099
        %v2104 = vsel %vm2096, %v2091, %v2100
        %v2105 = vld [vmem:[#allocation14] sm:$0xff]
        %v2106 = vld [vmem:[#allocation14 + $0x8] sm:$0xff]
        %v2107 = vld [vmem:[#allocation14 + $0x10] sm:$0xff]
        %v2108 = vld [vmem:[#allocation14 + $0x18] sm:$0xff]
        %v2109 = vld [vmem:[#allocation14 + $0x20] sm:$0xff]
        %v2110 = vld [vmem:[#allocation14 + $0x28] sm:$0xff]
        %v2111 = vld [vmem:[#allocation14 + $0x30] sm:$0xff]
        %v2112 = vld [vmem:[#allocation14 + $0x38] sm:$0xff]
        %v2113 = vld [vmem:[#allocation14 + $0x40] sm:$0xff]
        %v2114 = vld [vmem:[#allocation14 + $0x48] sm:$0xff]
        %v2115 = vld [vmem:[#allocation14 + $0x50] sm:$0xff]
        %v2116 = vld [vmem:[#allocation14 + $0x58] sm:$0xff]
        %v2117 = vld [vmem:[#allocation14 + $0x60] sm:$0xff]
        %v2118 = vld [vmem:[#allocation14 + $0x68] sm:$0xff]
        %v2119 = vld [vmem:[#allocation14 + $0x70] sm:$0xff]
        %v2120 = vld [vmem:[#allocation14 + $0x78] sm:$0xff]
        %v2121 = vld [vmem:[#allocation14 + $0x80] sm:$0xff]
        %v2122 = vld [vmem:[#allocation14 + $0x88] sm:$0xff]
        %v2123 = vld [vmem:[#allocation14 + $0x90] sm:$0xff]
        %v2124 = vld [vmem:[#allocation14 + $0x98] sm:$0xff]
        %v2125 = vld [vmem:[#allocation14 + $0xa0] sm:$0xff]
        %v2126 = vld [vmem:[#allocation14 + $0xa8] sm:$0xff]
        %v2127 = vld [vmem:[#allocation14 + $0xb0] sm:$0xff]
        %v2128 = vld [vmem:[#allocation14 + $0xb8] sm:$0xff]
        %v2129 = vld [vmem:[#allocation14 + $0xc0] sm:$0xff]
        %v2130 = vld [vmem:[#allocation14 + $0xc8] sm:$0xff]
        %v2131 = vld [vmem:[#allocation14 + $0xd0] sm:$0xff]
        %v2132 = vld [vmem:[#allocation14 + $0xd8] sm:$0xff]
        %v2133 = vld [vmem:[#allocation14 + $0xe0] sm:$0xff]
        %v2134 = vld [vmem:[#allocation14 + $0xe8] sm:$0xff]
        %v2135 = vld [vmem:[#allocation14 + $0xf0] sm:$0xff]
        %v2136 = vld [vmem:[#allocation14 + $0xf8] sm:$0xff]
        %v2137 = vld [vmem:[%s12] sm:$0x1]
        %v2139 = vlaneseq
        %v2140 = vshrl.u32 %v2139, 7
        %v2141 = vsub.s32 0, %v2140
        %v2142 = vrot.slane %v2137, %v2141
        %2144 = vmatprep.subr.mxu0 0.0
        %2145 = vmatpush1.msra.mxu0 %v2105
        %2146 = vmatprep.subr.mxu0 0.0
        %2147 = vmatpush1.msra.mxu0 %v2106
        %2148 = vmatprep.subr.mxu0 0.0
        %2149 = vmatpush1.msra.mxu0 %v2107
        %2150 = vmatprep.subr.mxu0 0.0
        %2151 = vmatpush1.msra.mxu0 %v2108
        %2152 = vmatprep.subr.mxu0 0.0
        %2153 = vmatpush1.msra.mxu0 %v2109
        %2154 = vmatprep.subr.mxu0 0.0
        %2155 = vmatpush1.msra.mxu0 %v2110
        %2156 = vmatprep.subr.mxu0 0.0
        %2157 = vmatpush1.msra.mxu0 %v2111
        %2158 = vmatprep.subr.mxu0 0.0
        %2159 = vmatpush1.msra.mxu0 %v2112
        %2160 = vmatprep.subr.mxu0 0.0
        %2161 = vmatpush1.msra.mxu0 %v2113
        %2162 = vmatprep.subr.mxu0 0.0
        %2163 = vmatpush1.msra.mxu0 %v2114
        %2164 = vmatprep.subr.mxu0 0.0
        %2165 = vmatpush1.msra.mxu0 %v2115
        %2166 = vmatprep.subr.mxu0 0.0
        %2167 = vmatpush1.msra.mxu0 %v2116
        %2168 = vmatprep.subr.mxu0 0.0
        %2169 = vmatpush1.msra.mxu0 %v2117
        %2170 = vmatprep.subr.mxu0 0.0
        %2171 = vmatpush1.msra.mxu0 %v2118
        %2172 = vmatprep.subr.mxu0 0.0
        %2173 = vmatpush1.msra.mxu0 %v2119
        %2174 = vmatprep.subr.mxu0 0.0
        %2175 = vmatpush1.msra.mxu0 %v2120
        %2176 = vmatprep.subr.mxu0 0.0
        %2177 = vmatpush1.msra.mxu0 %v2121
        %2178 = vmatprep.subr.mxu0 0.0
        %2179 = vmatpush1.msra.mxu0 %v2122
        %2180 = vmatprep.subr.mxu0 0.0
        %2181 = vmatpush1.msra.mxu0 %v2123
        %2182 = vmatprep.subr.mxu0 0.0
        %2183 = vmatpush1.msra.mxu0 %v2124
        %2184 = vmatprep.subr.mxu0 0.0
        %2185 = vmatpush1.msra.mxu0 %v2125
        %2186 = vmatprep.subr.mxu0 0.0
        %2187 = vmatpush1.msra.mxu0 %v2126
        %2188 = vmatprep.subr.mxu0 0.0
        %2189 = vmatpush1.msra.mxu0 %v2127
        %2190 = vmatprep.subr.mxu0 0.0
        %2191 = vmatpush1.msra.mxu0 %v2128
        %2192 = vmatprep.subr.mxu0 0.0
        %2193 = vmatpush1.msra.mxu0 %v2129
        %2194 = vmatprep.subr.mxu0 0.0
        %2195 = vmatpush1.msra.mxu0 %v2130
        %2196 = vmatprep.subr.mxu0 0.0
        %2197 = vmatpush1.msra.mxu0 %v2131
        %2198 = vmatprep.subr.mxu0 0.0
        %2199 = vmatpush1.msra.mxu0 %v2132
        %2200 = vmatprep.subr.mxu0 0.0
        %2201 = vmatpush1.msra.mxu0 %v2133
        %2202 = vmatprep.subr.mxu0 0.0
        %2203 = vmatpush1.msra.mxu0 %v2134
        %2204 = vmatprep.subr.mxu0 0.0
        %2205 = vmatpush1.msra.mxu0 %v2135
        %2206 = vmatprep.subr.mxu0 0.0
        %2207 = vmatpush1.msra.mxu0 %v2136
        %2208 = vmatprep.mubr.f32.mxu0 %v2102
        %2209 = vmatmul.mubr.f32.gmra.mrb[0].mxu0 %v2101
        %v2210 = vpop.f32.mrb[0].mxu0
        %v2211 = vadd.f32 %v2142, %v2210
        %v2212 = vpop.f32.mrb[0].mxu0
        %2213 = vmatprep.mubr.f32.mxu0 %v2104
        %2214 = vmatmul.mubr.f32.gmra.mrb[0].mxu0 %v2103
        %v2215 = vpop.f32.mrb[0].mxu0
        %v2216 = vadd.f32 %v2142, %v2215
        %v2217 = vpop.f32.mrb[0].mxu0
        %2218 = vdwg.mxu0
        %v2219 = vadd.f32 %v1970, %v2211
        %v2220 = vadd.f32 %v1971, %v2216
        %2221 = vadd.xlane.f32.xlu0 %v2219
        %v2222 = vpop.xlane.xlu0 %2221
        %2223 = vadd.xlane.f32.xlu0 %v2220
        %v2224 = vpop.xlane.xlu0 %2223
        %v2225 = vmul.f32 %v2222, %v1937
        %v2226 = vmul.f32 %v2224, %v1937
        %v2227 = vsub.f32 %v2219, %v2225
        %v2228 = vsub.f32 %v2220, %v2226
        %v2229 = vmul.f32 %v2227, %v2227
        %v2230 = vmul.f32 %v2228, %v2228
        %2231 = vadd.xlane.f32.xlu0 %v2229
        %v2232 = vpop.xlane.xlu0 %2231
        %2233 = vadd.xlane.f32.xlu0 %v2230
        %v2234 = vpop.xlane.xlu0 %2233
        %v2235 = vmul.f32 %v2232, %v1937
        %v2236 = vmul.f32 %v2234, %v1937
        %v2237 = vadd.f32 %v2235, 1e-05
        %v2238 = vadd.f32 %v2236, 1e-05
        %v2239 = vrsqrt.pop %v2237
        %v2240 = vrsqrt.pop %v2238
        %v2241 = vmul.f32 %v2227, %v2239
        %v2242 = vmul.f32 %v2228, %v2240
        %v2244 = vlaneseq
        %v2245 = vshrl.u32 %v2244, 7
        %v2246 = vsub.s32 0, %v2245
        %v2247 = vrot.slane %v1929, %v2246
        %v2249 = vmul.f32 %v2241, %v2247
        %v2250 = vmul.f32 %v2242, %v2247
        %v2252 = vlaneseq
        %v2253 = vshrl.u32 %v2252, 7
        %v2254 = vsub.s32 0, %v2253
        %v2255 = vrot.slane %v1930, %v2254
        %v2257 = vadd.f32 %v2249, %v2255
        %v2258 = vadd.f32 %v2250, %v2255
        %2259 = vst [vmem:[%s599] sm:$0xff] %v2257
        %2260 = vst [vmem:[%s599 + $0x8] sm:$0xff] %v2258
        %s2261 = sand.u32 %s377, 1
        %s2262 = scalar_lea.sflag [#allocation7], %s2261
        %s2263 = sand.u32 %s377, 1
        %s2264 = smul.addr %s2263, 16
        %s2265 = scalar_lea.vmem [#allocation16], %s2264
        // Predicated region
        $region123: #{tpu_custom_call.1} parent=79 // pred_check
          %p2266 = pneg %p387
        $region124: #{tpu_custom_call.1} parent=79 // pred_check_branch
          %2268 = sbr.rel (%p2266) target = $region126
        $region125: #{tpu_custom_call.1} parent=79 // pred_region
          %s2269 = smul.u32 2, %s40
          %s2271 = ssub.s32 256, 256
          %2272 = vsyncadd %s2262, %s2271
          %s2273 = smul.addr %s39, 8
          %s2274 = sadd.s32 %s2269, %s2273
          %s2275 = smul.addr %s2274, 128
          %s2276 = scalar_lea.hbm %s15, %s2275
          %s2277 = sshll.u32 %s2265, 4
          %s2278 = int_to_ptr.vmem [resolvable:$true] %s2277
          %2283 = dma.vmem_to_hbm [thread:$0]  %s2278, 256, %s2276, %s2262, 128, 128, 8
        $region126: #{tpu_custom_call.1} parent=79 // pred_fallthru
          _
      $region80: #{tpu_custom_call.1} parent=5 // pred_fallthru
        _
      %p2284 = scmp.le.s32.totalorder 2, %s30
      // Predicated region
      $region127: #{tpu_custom_call.1} parent=5 // pred_check
        %p2285 = pneg %p2284
      $region128: #{tpu_custom_call.1} parent=5 // pred_check_branch
        %2287 = sbr.rel (%p2285) target = $region130
      $region129: #{tpu_custom_call.1} parent=5 // pred_region
        %s2288 = ssub.s32 %s30, 2
        // Predicated region
        $region131: #{tpu_custom_call.1} parent=129 // pred_check
          %p2289 = pneg %p393
        $region132: #{tpu_custom_call.1} parent=129 // pred_check_branch
          %2291 = sbr.rel (%p2289) target = $region134
        $region133: #{tpu_custom_call.1} parent=129 // pred_region
          %s2292 = sand.u32 %s378, 1
          %s2293 = scalar_lea.sflag [#allocation7], %s2292
          %s2294 = sand.u32 %s378, 1
          %s2295 = smul.addr %s2294, 16
          %s2296 = scalar_lea.vmem [#allocation16], %s2295
          %2297 = dma.done %s2293, 256
        $region134: #{tpu_custom_call.1} parent=129 // pred_fallthru
          _
      $region130: #{tpu_custom_call.1} parent=5 // pred_fallthru
        _
    $region6: #{tpu_custom_call.1} parent=1 // loop_footer
      %s34 = sadd.s32 1, %s30
    $region7: #{tpu_custom_call.1} parent=1 // loop_footer_branch
      %29 = sbr.rel target = $region3
    $region8: #{tpu_custom_call.1} parent=1 // loop_exit
      _
    %2298 = vsyncpa [#allocation6], 1
    %s2299 = scalar_lea.sflag [#allocation6], 1
    %2300 = vsyncpa %s2299, 1
    %2301 = vsyncpa [#allocation9], 1
    %2302 = vsyncpa [#allocation12], 1
    %2303 = vsyncpa [#allocation15], 1
    %2304 = vsyncpa [#allocation7], 1
    %s2305 = scalar_lea.sflag [#allocation7], 1
    %2306 = vsyncpa %s2305, 1

</llo_original>
